<compile_context>
chip_gen: v6e
topology: v6e:2x2x1
jax: 0.10.0
libtpu: 0.0.40
codegen_flags: <defaults>
</compile_context>

<pallas_src>
import math

import jax
import jax.numpy as jnp
from jax.experimental import pallas as pl
from jax.experimental.pallas import tpu as pltpu


def _round_up(x, m):
    return ((x + m - 1) // m) * m


def _cdiv(a, b):
    return -(-a // b)


def _tpu_generation():
    try:
        kind = jax.devices()[0].device_kind.lower()
    except Exception:
        return "unknown"
    if "v5 lite" in kind or "v5e" in kind or "v5lite" in kind:
        return "v5e"
    if "v6" in kind:
        return "v6e"
    if "v7" in kind or "7x" in kind:
        return "v7x"
    return "unknown"


# Per-generation tuning: (vmem_limit_bytes to request, target folded rows per block,
# minimum number of grid steps to expose for pipelining / megacore sharding).
#   v5e: 128 MiB physical VMEM (16 MiB default scoped) -> modest tiles, raised limit.
#   v6e: 128 MiB physical (32 MiB default scoped)      -> big tiles.
#   v7x: 64 MiB physical (32 MiB default scoped)       -> keep working set well under
#        48 MiB and aim for >= 4 steps so each of the 2 TensorCores pipelines >= 2.
_CHIP_CONFIG = {
    "v5e":     (64 * 2**20, 1024, 2),
    "v6e":     (64 * 2**20, 2048, 2),
    "v7x":     (48 * 2**20, 2048, 4),
    "unknown": (32 * 2**20, 1024, 2),
}


def _ms2_output_kernel(x_ref, w_ref, b_ref, o_ref):
    # x_ref: (tr, G*K) f32      -- cast to bf16 in-kernel (saves a wrapper HBM pass)
    # w_ref: (G*K, G*N) bf16    -- resident block-diagonal weight
    # b_ref: (1, G*N) f32       -- resident bias
    # o_ref: (tr, G*N)          -- lane-dense output (last dim % 128 == 0 -> unmasked vst)
    x = x_ref[...].astype(jnp.bfloat16)
    acc = jnp.dot(x, w_ref[...], preferred_element_type=jnp.float32)
    o_ref[...] = jnp.maximum(acc + b_ref[...], 0.0).astype(o_ref.dtype)


def fold_output_params(w_all, b_all):
    """w_all: (K, N_total) = concat([Wi.T], axis=1); b_all: (N_total,).

    Returns (w_bd, b_fold, g): block-diagonal bf16 weight (g*K, g*N), tiled f32 bias
    (1, g*N), and the token fold factor g.  g tokens are folded into the lane axis so
    g*N is a multiple of 128 (lane-dense, unmasked stores).  Call once per model.
    """
    K, N = w_all.shape
    g = 128 // math.gcd(N, 128)  # smallest g with (g*N) % 128 == 0; always <= 128
    # TODO(synk): on v5e the g-fold multiplies MXU work by g (~0.9x of HBM time for N=12);
    # a v5e-specific variant with N padded to 16 and g=8 would cut that 3x.
    w_bd = jnp.kron(jnp.eye(g, dtype=jnp.float32),
                    w_all.astype(jnp.float32)).astype(jnp.bfloat16)
    b_fold = jnp.tile(b_all.astype(jnp.float32), g).reshape(1, g * N)
    return w_bd, b_fold, g


def peptide_ms2_output(feature, w_bd, b_fold, g, *, out_dtype=jnp.float32):
    """feature: (B, S, K) float32; (w_bd, b_fold, g) from fold_output_params.

    Returns (B, S, N_total) in out_dtype (float32 by default to match the PyTorch module;
    pass jnp.bfloat16 if the consumer tolerates it -> ~20% less HBM traffic).
    """
    B, S, K = feature.shape
    GK, GN = w_bd.shape
    assert GK == g * K, "w_bd does not match feature width / fold factor"
    N = GN // g
    M = B * S

    chip = _tpu_generation()
    vmem_limit, tr_target, min_steps = _CHIP_CONFIG[chip]

    # ---- fold g tokens into the lane axis ---------------------------------------
    # Free row-major view when M % g == 0; otherwise a one-off pad copy of the input.
    M_pad = _round_up(M, g)
    x2d = feature.reshape(M, K)
    if M_pad != M:
        # TODO(synk): for large M not divisible by g, handle the (< g)-token tail outside
        # the kernel instead of paying a full pad pass + output unpad slice here.
        x2d = jnp.pad(x2d, ((0, M_pad - M), (0, 0)))
    R = M_pad // g                       # folded rows (g tokens each)
    x_fold = x2d.reshape(R, GK)

    # ---- tile sizing: fill the VMEM budget, but expose >= min_steps grid steps ----
    out_isz = jnp.dtype(out_dtype).itemsize
    # double-buffered input+output blocks + in-kernel bf16 copy + f32 accumulator, per row
    per_row = 2 * GK * 4 + 2 * GN * out_isz + GK * 2 + GN * 4
    resident = GK * GN * 2 + GN * 4 + (2 << 20)        # single-buffered weight/bias + slack
    budget_rows = max(16, (vmem_limit - resident) // per_row)
    steps_rows = _round_up(_cdiv(R, min_steps), 16)    # cap so grid >= min_steps if M allows
    tr = max(16, min(_round_up(tr_target, 16), (budget_rows // 16) * 16, steps_rows))
    grid_r = _cdiv(R, tr)                              # partial last block is masked by Pallas

    cost = pl.CostEstimate(
        flops=2 * grid_r * tr * GK * GN,               # actual MXU work (block-diag contraction)
        transcendentals=0,
        bytes_accessed=M_pad * K * 4 + M_pad * N * out_isz + GK * GN * 2 + GN * 4,
    )

    out_fold = pl.pallas_call(
        _ms2_output_kernel,
        out_shape=jax.ShapeDtypeStruct((R, GN), out_dtype),
        grid_spec=pltpu.PrefetchScalarGridSpec(
            num_scalar_prefetch=0,
            grid=(grid_r,),
            in_specs=[
                # activations: tiled over folded token rows
                pl.BlockSpec((tr, GK), lambda i: (i, 0)),
                # resident weight / bias: constant index map, single-buffered
                pl.BlockSpec((GK, GN), lambda i: (0, 0), pipeline_mode=pl.Buffered(1)),
                pl.BlockSpec((1, GN), lambda i: (0, 0), pipeline_mode=pl.Buffered(1)),
            ],
            out_specs=pl.BlockSpec((tr, GN), lambda i: (i, 0)),
        ),
        compiler_params=pltpu.CompilerParams(
            dimension_semantics=("parallel",),
            vmem_limit_bytes=vmem_limit,
        ),
        cost_estimate=cost,
    )(x_fold, w_bd, b_fold)

    # (R, g*N) row-major == (M_pad, N) row-major: free reshape.
    out2d = out_fold.reshape(M_pad, N)
    if M_pad != M:
        out2d = out2d[:M]                # drop pad rows only when padding was needed
    return out2d.reshape(B, S, N)


def init_params(key, in_features, num_fragment_ion_types, loss_types):
    """Per-layer Linear params (PyTorch (out, in) layout) plus the concatenated
    (K, N_total) / (N_total,) kernel-layout parameters matching torch.concat(dim=-1)."""
    n_layers = 1 + len(loss_types)       # output_main + one layer per loss type
    keys = jax.random.split(key, 2 * n_layers)
    ws, bs = [], []
    bound = 1.0 / jnp.sqrt(jnp.float32(in_features))
    for li in range(n_layers):
        w = jax.random.uniform(
            keys[2 * li], (num_fragment_ion_types, in_features),
            minval=-bound, maxval=bound, dtype=jnp.float32)
        b = jax.random.uniform(
            keys[2 * li + 1], (num_fragment_ion_types,),
            minval=-bound, maxval=bound, dtype=jnp.float32)
        ws.append(w)
        bs.append(b)
    w_all = jnp.concatenate([w.T for w in ws], axis=1)   # (in_features, n_layers*n_ion)
    b_all = jnp.concatenate(bs, axis=0)                  # (n_layers*n_ion,)
    return ws, bs, w_all, b_all


def reference_forward(feature, ws, bs):
    """Pure-JAX reference mirroring the PyTorch module structure exactly."""
    outs = []
    for w, b in zip(ws, bs):
        outs.append(jax.nn.relu(jnp.einsum("bsk,nk->bsn", feature, w) + b))
    return jnp.concatenate(outs, axis=-1)


if __name__ == "__main__":
    # Synthetic config: 2 fragment types x 2 fragment charges -> 4 ion types,
    # loss_types = ["NH3", "H2O"] -> 3 output layers total, out dim = 12.
    in_features = 32
    fragment_types = ["b", "y"]
    fragment_charges = [1, 2]
    loss_types = ["NH3", "H2O"]
    num_fragment_ion_types = len(fragment_types) * len(fragment_charges)
    n_total = (1 + len(loss_types)) * num_fragment_ion_types

    key = jax.random.PRNGKey(0)
    k_feat, k_param, k_feat2 = jax.random.split(key, 3)

    ws, bs, w_all, b_all = init_params(k_param, in_features,
                                       num_fragment_ion_types, loss_types)
    w_bd, b_fold, g = fold_output_params(w_all, b_all)

    # ---- small shape (exercises the padded, single-block path) -------------------
    B, S = 2, 8
    feature = jax.random.normal(k_feat, (B, S, in_features), dtype=jnp.float32)
    out = jax.block_until_ready(peptide_ms2_output(feature, w_bd, b_fold, g))
    assert out.shape == (B, S, n_total)

    # Strict check vs a reference mirroring the kernel's bf16-input numerics.
    feat_bf = feature.astype(jnp.bfloat16).astype(jnp.float32)
    ws_bf = [w.astype(jnp.bfloat16).astype(jnp.float32) for w in ws]
    ref_bf = reference_forward(feat_bf, ws_bf, bs)
    assert jnp.allclose(out, ref_bf, atol=1e-4, rtol=1e-4), "mismatch vs bf16-path reference"

    # Loose check vs the full-f32 module-equivalent reference (bf16 rounding only).
    ref_f32 = reference_forward(feature, ws, bs)
    assert jnp.allclose(out, ref_f32, atol=3e-2, rtol=3e-2), "mismatch vs f32 reference"

    # ---- larger shape (exercises the zero-copy M % g == 0, multi-step grid path) -
    B2, S2 = 8, 512                       # M = 4096 tokens, a multiple of g
    feature2 = jax.random.normal(k_feat2, (B2, S2, in_features), dtype=jnp.float32)
    out2 = jax.block_until_ready(peptide_ms2_output(feature2, w_bd, b_fold, g))
    ref2 = reference_forward(feature2.astype(jnp.bfloat16).astype(jnp.float32), ws_bf, bs)
    assert out2.shape == (B2, S2, n_total)
    assert jnp.allclose(out2, ref2, atol=1e-4, rtol=1e-4), "mismatch on larger shape"

    print("KERNEL_OK")
</pallas_src>

<mosaic_0001>
module attributes {stable_mosaic.version = 11 : i64} {
  func.func @_ms2_output_kernel(%arg0: i32, %arg1: memref<16x1024xf32, #tpu.memory_space<vmem>>, %arg2: memref<1024x384xbf16, #tpu.memory_space<vmem>>, %arg3: memref<1x384xf32, #tpu.memory_space<vmem>>, %arg4: memref<16x384xf32, #tpu.memory_space<vmem>>) attributes {dimension_semantics = [#tpu.dimension_semantics<parallel>], iteration_bounds = array<i64: 1>, scalar_prefetch = 0 : i64, scratch_operands = 0 : i64, tpu.core_type = #tpu.core_type<tc>, window_params = [{transform_indices = @transform_0, window_bounds = array<i64: 16, 1024>}, {pipeline_mode = #tpu.pipeline_mode<synchronous>, transform_indices = @transform_1, window_bounds = array<i64: 1024, 384>}, {pipeline_mode = #tpu.pipeline_mode<synchronous>, transform_indices = @transform_2, window_bounds = array<i64: 1, 384>}, {transform_indices = @transform_3, window_bounds = array<i64: 16, 384>}]} {
    %c0 = arith.constant 0 : index
    %c0_0 = arith.constant 0 : index
    %0 = vector.load %arg1[%c0, %c0_0] : memref<16x1024xf32, #tpu.memory_space<vmem>>, vector<16x1024xf32>
    %1 = arith.truncf %0 : vector<16x1024xf32> to vector<16x1024xbf16>
    %c0_1 = arith.constant 0 : index
    %c0_2 = arith.constant 0 : index
    %2 = vector.load %arg2[%c0_1, %c0_2] : memref<1024x384xbf16, #tpu.memory_space<vmem>>, vector<1024x384xbf16>
    %cst = arith.constant dense<0.000000e+00> : vector<16x384xf32>
    %3 = tpu.matmul %1, %2, %cst {dimension_numbers = #tpu.dot_dimension_numbers<[1], [0], [0], [1], [0, 0, 1, 1], [], []>} : vector<16x1024xbf16>, vector<1024x384xbf16>, vector<16x384xf32> -> vector<16x384xf32>
    %c0_3 = arith.constant 0 : index
    %c0_4 = arith.constant 0 : index
    %4 = vector.load %arg3[%c0_3, %c0_4] : memref<1x384xf32, #tpu.memory_space<vmem>>, vector<1x384xf32>
    %5 = vector.broadcast %4 : vector<1x384xf32> to vector<16x384xf32>
    %6 = arith.addf %3, %5 : vector<16x384xf32>
    %cst_5 = arith.constant 0.000000e+00 : f32
    %7 = vector.broadcast %cst_5 : f32 to vector<16x384xf32>
    %8 = arith.maximumf %6, %7 : vector<16x384xf32>
    %c0_6 = arith.constant 0 : index
    %c0_7 = arith.constant 0 : index
    %9 = vector.load %arg4[%c0_6, %c0_7] : memref<16x384xf32, #tpu.memory_space<vmem>>, vector<16x384xf32>
    tpu.vector_store %arg4[%c0_6, %c0_7], %8 {strides = array<i32>} : memref<16x384xf32, #tpu.memory_space<vmem>>, vector<16x384xf32>,
    return
  }
  func.func @transform_0(%arg0: i32) -> (i32, i32) {
    %c0_i32 = arith.constant 0 : i32
    %c0_i32_0 = arith.constant 0 : i32
    return %arg0, %c0_i32 : i32, i32
  }
  func.func @transform_1(%arg0: i32) -> (i32, i32) {
    %c0_i32 = arith.constant 0 : i32
    %c0_i32_0 = arith.constant 0 : i32
    %c0_i32_1 = arith.constant 0 : i32
    return %c0_i32, %c0_i32_0 : i32, i32
  }
  func.func @transform_2(%arg0: i32) -> (i32, i32) {
    %c0_i32 = arith.constant 0 : i32
    %c0_i32_0 = arith.constant 0 : i32
    %c0_i32_1 = arith.constant 0 : i32
    return %c0_i32, %c0_i32_0 : i32, i32
  }
  func.func @transform_3(%arg0: i32) -> (i32, i32) {
    %c0_i32 = arith.constant 0 : i32
    %c0_i32_0 = arith.constant 0 : i32
    return %arg0, %c0_i32 : i32, i32
  }
}

</mosaic_0001>

<llo_original>
// kernel: tpu_custom_call.1
$region0: #{tpu_custom_call.1}
  #allocation0 [shape = 'u32[]', space=smem, size = 0x4, offset = 0x4, fixed_abs, tag = 'smem constant byte address 0x4 - core index']
  #allocation1 [shape = 'u32[144,128]{1,0:T(1,128)}', space=vmem, size = 0x12000, scoped, tag = 'internal scratch']
  %s0 = inlined_call_operand.hbm [shape: f32[1,1024], index: 0, kind: input, shape index: {}]
  %s1 = inlined_call_operand.hbm [shape: bf16[1024,384], index: 1, kind: input, shape index: {}]
  %s2 = inlined_call_operand.vmem [shape: f32[1,384], index: 2, kind: input, shape index: {}]
  %s3 = inlined_call_operand.hbm [shape: f32[1,384], index: 3, kind: output, shape index: {}]
  %s4 = sld [smem:[#allocation0]]
  $region30: #{tpu_custom_call.1} parent=0
    _
  %s6 = ssub.s32 1, %s4
  %s7 = scalar_select 0, %s6, %s4
  $region1: #{tpu_custom_call.1} parent=0
    #allocation2 [shape = 'u8[65536]{0}', space=vmem, size = 0x10000, scoped, tag = 'input window, operand 0, single buffered']
    #allocation3 [shape = 's32[1]{0}', space=sflag, size = 0x4, scoped, tag = 'scoped memory for tpu_custom_call.1']
    #allocation4 [shape = 's32[1]{0}', space=sflag, size = 0x4, scoped, tag = 'scoped memory for tpu_custom_call.1']
    #allocation5 [shape = 'u8[786432]{0}', space=vmem, size = 0xc0000, scoped, tag = 'input window, operand 1, single buffered']
    #allocation6 [shape = 's32[1]{0}', space=sflag, size = 0x4, scoped, tag = 'scoped memory for tpu_custom_call.1']
    #allocation7 [shape = 'u8[24576]{0}', space=vmem, size = 0x6000, scoped, tag = 'output window, operand 0, single buffered']
    %8 = vsyncpa [#allocation3], 0
    %9 = vsyncpa [#allocation6], 0
    %10 = vsyncpa [#allocation4], 0
    // Predicated region
    $region2: #{tpu_custom_call.1} parent=1 // pred_check
      _
    $region3: #{tpu_custom_call.1} parent=1 // pred_check_branch
      %12 = sbr.rel (0) target = $region5
    $region4: #{tpu_custom_call.1} parent=1 // pred_region
      %s14 = ssub.s32 2048, 128
      %15 = vsyncadd [#allocation3], %s14
      %s16 = sshll.u32 [#allocation2], 4
      %s17 = int_to_ptr.vmem [resolvable:$true] %s16
      %22 = dma.hbm_to_vmem [thread:$0]  %s0, 128, %s17, [#allocation3], 128, 128, 8
    $region5: #{tpu_custom_call.1} parent=1 // pred_fallthru
      _
    // Predicated region
    $region6: #{tpu_custom_call.1} parent=1 // pred_check
      _
    $region7: #{tpu_custom_call.1} parent=1 // pred_check_branch
      %24 = sbr.rel (0) target = $region9
    $region8: #{tpu_custom_call.1} parent=1 // pred_region
      %s26 = ssub.s32 24576, 24576
      %27 = vsyncadd [#allocation6], %s26
      %s28 = sshll.u32 [#allocation5], 4
      %s29 = int_to_ptr.vmem [resolvable:$true] %s28
      %34 = dma.hbm_to_vmem [thread:$0]  %s1, 24576, %s29, [#allocation6], 192, 192, 12
    $region9: #{tpu_custom_call.1} parent=1 // pred_fallthru
      _
    // Predicated region
    $region10: #{tpu_custom_call.1} parent=1 // pred_check
      _
    $region11: #{tpu_custom_call.1} parent=1 // pred_check_branch
      %36 = sbr.rel (0) target = $region13
    $region12: #{tpu_custom_call.1} parent=1 // pred_region
      _
    $region13: #{tpu_custom_call.1} parent=1 // pred_fallthru
      _
    // Predicated region
    $region14: #{tpu_custom_call.1} parent=1 // pred_check
      _
    $region15: #{tpu_custom_call.1} parent=1 // pred_check_branch
      %38 = sbr.rel (0) target = $region17
    $region16: #{tpu_custom_call.1} parent=1 // pred_region
      %39 = dma.done [#allocation3], 2048
    $region17: #{tpu_custom_call.1} parent=1 // pred_fallthru
      _
    // Predicated region
    $region18: #{tpu_custom_call.1} parent=1 // pred_check
      _
    $region19: #{tpu_custom_call.1} parent=1 // pred_check_branch
      %41 = sbr.rel (0) target = $region21
    $region20: #{tpu_custom_call.1} parent=1 // pred_region
      %42 = dma.done [#allocation6], 24576
    $region21: #{tpu_custom_call.1} parent=1 // pred_fallthru
      _
    %v44 = vld [vmem:[#allocation2] sm:$0xff]
    %v45 = vld [vmem:[#allocation2 + $0x8] sm:$0xff]
    %v46 = vld [vmem:[#allocation2 + $0x10] sm:$0xff]
    %v47 = vld [vmem:[#allocation2 + $0x18] sm:$0xff]
    %v48 = vld [vmem:[#allocation2 + $0x20] sm:$0xff]
    %v49 = vld [vmem:[#allocation2 + $0x28] sm:$0xff]
    %v50 = vld [vmem:[#allocation2 + $0x30] sm:$0xff]
    %v51 = vld [vmem:[#allocation2 + $0x38] sm:$0xff]
    %v52 = vld [vmem:[#allocation2 + $0x40] sm:$0xff]
    %v53 = vld [vmem:[#allocation2 + $0x48] sm:$0xff]
    %v54 = vld [vmem:[#allocation2 + $0x50] sm:$0xff]
    %v55 = vld [vmem:[#allocation2 + $0x58] sm:$0xff]
    %v56 = vld [vmem:[#allocation2 + $0x60] sm:$0xff]
    %v57 = vld [vmem:[#allocation2 + $0x68] sm:$0xff]
    %v58 = vld [vmem:[#allocation2 + $0x70] sm:$0xff]
    %v59 = vld [vmem:[#allocation2 + $0x78] sm:$0xff]
    %v76 = vcombine.low %v44, %v45
    %v77 = vcombine.high %v44, %v45
    %v78 = vcombine.low %v46, %v47
    %v79 = vcombine.high %v46, %v47
    %v80 = vcombine.low %v48, %v49
    %v81 = vcombine.high %v48, %v49
    %v82 = vcombine.low %v50, %v51
    %v83 = vcombine.high %v50, %v51
    %v85 = vunpack.c.l.s4 1966171168
    %v86 = vunpack.c.0.s8 %v85
    %v87 = vlaneseq
    %v88 = vshrl.u32 %v87, 7
    %v89 = vsub.s32 %v86, %v88
    %v90 = vrot.slane %v76, %v89
    %v92 = vunpack.c.l.s4 1966171168
    %v93 = vunpack.c.0.s8 %v92
    %v94 = vlaneseq
    %v95 = vshrl.u32 %v94, 7
    %v96 = vsub.s32 %v93, %v95
    %v97 = vrot.slane %v77, %v96
    %v99 = vunpack.c.l.s4 1966171168
    %v100 = vunpack.c.0.s8 %v99
    %v101 = vlaneseq
    %v102 = vshrl.u32 %v101, 7
    %v103 = vsub.s32 %v100, %v102
    %v104 = vrot.slane %v78, %v103
    %v106 = vunpack.c.l.s4 1966171168
    %v107 = vunpack.c.0.s8 %v106
    %v108 = vlaneseq
    %v109 = vshrl.u32 %v108, 7
    %v110 = vsub.s32 %v107, %v109
    %v111 = vrot.slane %v79, %v110
    %v113 = vunpack.c.l.s4 1966171168
    %v114 = vunpack.c.0.s8 %v113
    %v115 = vlaneseq
    %v116 = vshrl.u32 %v115, 7
    %v117 = vsub.s32 %v114, %v116
    %v118 = vrot.slane %v80, %v117
    %v120 = vunpack.c.l.s4 1966171168
    %v121 = vunpack.c.0.s8 %v120
    %v122 = vlaneseq
    %v123 = vshrl.u32 %v122, 7
    %v124 = vsub.s32 %v121, %v123
    %v125 = vrot.slane %v81, %v124
    %v127 = vunpack.c.l.s4 1966171168
    %v128 = vunpack.c.0.s8 %v127
    %v129 = vlaneseq
    %v130 = vshrl.u32 %v129, 7
    %v131 = vsub.s32 %v128, %v130
    %v132 = vrot.slane %v82, %v131
    %v134 = vunpack.c.l.s4 1966171168
    %v135 = vunpack.c.0.s8 %v134
    %v136 = vlaneseq
    %v137 = vshrl.u32 %v136, 7
    %v138 = vsub.s32 %v135, %v137
    %v139 = vrot.slane %v83, %v138
    %v140 = vcombine.low %v90, %v104
    %v141 = vcombine.high %v90, %v104
    %v142 = vcombine.low %v97, %v111
    %v143 = vcombine.high %v97, %v111
    %v144 = vcombine.low %v118, %v132
    %v145 = vcombine.high %v118, %v132
    %v146 = vcombine.low %v125, %v139
    %v147 = vcombine.high %v125, %v139
    %v149 = vunpack.c.l.s4 1966171168
    %v150 = vunpack.c.0.s8 %v149
    %v151 = vlaneseq
    %v152 = vshrl.u32 %v151, 7
    %v153 = vsub.s32 %v150, %v152
    %v154 = vrot.slane %v140, %v153
    %v156 = vunpack.c.l.s4 1966171168
    %v157 = vunpack.c.0.s8 %v156
    %v158 = vlaneseq
    %v159 = vshrl.u32 %v158, 7
    %v160 = vsub.s32 %v157, %v159
    %v161 = vrot.slane %v142, %v160
    %v163 = vunpack.c.l.s4 1966171168
    %v164 = vunpack.c.0.s8 %v163
    %v165 = vlaneseq
    %v166 = vshrl.u32 %v165, 7
    %v167 = vsub.s32 %v164, %v166
    %v168 = vrot.slane %v141, %v167
    %v170 = vunpack.c.l.s4 1966171168
    %v171 = vunpack.c.0.s8 %v170
    %v172 = vlaneseq
    %v173 = vshrl.u32 %v172, 7
    %v174 = vsub.s32 %v171, %v173
    %v175 = vrot.slane %v143, %v174
    %v177 = vunpack.c.l.s4 1966171168
    %v178 = vunpack.c.0.s8 %v177
    %v179 = vlaneseq
    %v180 = vshrl.u32 %v179, 7
    %v181 = vsub.s32 %v178, %v180
    %v182 = vrot.slane %v144, %v181
    %v184 = vunpack.c.l.s4 1966171168
    %v185 = vunpack.c.0.s8 %v184
    %v186 = vlaneseq
    %v187 = vshrl.u32 %v186, 7
    %v188 = vsub.s32 %v185, %v187
    %v189 = vrot.slane %v146, %v188
    %v191 = vunpack.c.l.s4 1966171168
    %v192 = vunpack.c.0.s8 %v191
    %v193 = vlaneseq
    %v194 = vshrl.u32 %v193, 7
    %v195 = vsub.s32 %v192, %v194
    %v196 = vrot.slane %v145, %v195
    %v198 = vunpack.c.l.s4 1966171168
    %v199 = vunpack.c.0.s8 %v198
    %v200 = vlaneseq
    %v201 = vshrl.u32 %v200, 7
    %v202 = vsub.s32 %v199, %v201
    %v203 = vrot.slane %v147, %v202
    %v204 = vcombine.low %v154, %v182
    %v205 = vcombine.high %v154, %v182
    %v206 = vcombine.low %v161, %v189
    %v207 = vcombine.high %v161, %v189
    %v208 = vcombine.low %v168, %v196
    %v209 = vcombine.high %v168, %v196
    %v210 = vcombine.low %v175, %v203
    %v211 = vcombine.high %v175, %v203
    %v212 = vcombine.low %v52, %v53
    %v213 = vcombine.high %v52, %v53
    %v214 = vcombine.low %v54, %v55
    %v215 = vcombine.high %v54, %v55
    %v216 = vcombine.low %v56, %v57
    %v217 = vcombine.high %v56, %v57
    %v218 = vcombine.low %v58, %v59
    %v219 = vcombine.high %v58, %v59
    %v221 = vunpack.c.l.s4 1966171168
    %v222 = vunpack.c.0.s8 %v221
    %v223 = vlaneseq
    %v224 = vshrl.u32 %v223, 7
    %v225 = vsub.s32 %v222, %v224
    %v226 = vrot.slane %v212, %v225
    %v228 = vunpack.c.l.s4 1966171168
    %v229 = vunpack.c.0.s8 %v228
    %v230 = vlaneseq
    %v231 = vshrl.u32 %v230, 7
    %v232 = vsub.s32 %v229, %v231
    %v233 = vrot.slane %v213, %v232
    %v235 = vunpack.c.l.s4 1966171168
    %v236 = vunpack.c.0.s8 %v235
    %v237 = vlaneseq
    %v238 = vshrl.u32 %v237, 7
    %v239 = vsub.s32 %v236, %v238
    %v240 = vrot.slane %v214, %v239
    %v242 = vunpack.c.l.s4 1966171168
    %v243 = vunpack.c.0.s8 %v242
    %v244 = vlaneseq
    %v245 = vshrl.u32 %v244, 7
    %v246 = vsub.s32 %v243, %v245
    %v247 = vrot.slane %v215, %v246
    %v249 = vunpack.c.l.s4 1966171168
    %v250 = vunpack.c.0.s8 %v249
    %v251 = vlaneseq
    %v252 = vshrl.u32 %v251, 7
    %v253 = vsub.s32 %v250, %v252
    %v254 = vrot.slane %v216, %v253
    %v256 = vunpack.c.l.s4 1966171168
    %v257 = vunpack.c.0.s8 %v256
    %v258 = vlaneseq
    %v259 = vshrl.u32 %v258, 7
    %v260 = vsub.s32 %v257, %v259
    %v261 = vrot.slane %v217, %v260
    %v263 = vunpack.c.l.s4 1966171168
    %v264 = vunpack.c.0.s8 %v263
    %v265 = vlaneseq
    %v266 = vshrl.u32 %v265, 7
    %v267 = vsub.s32 %v264, %v266
    %v268 = vrot.slane %v218, %v267
    %v270 = vunpack.c.l.s4 1966171168
    %v271 = vunpack.c.0.s8 %v270
    %v272 = vlaneseq
    %v273 = vshrl.u32 %v272, 7
    %v274 = vsub.s32 %v271, %v273
    %v275 = vrot.slane %v219, %v274
    %v276 = vcombine.low %v226, %v240
    %v277 = vcombine.high %v226, %v240
    %v278 = vcombine.low %v233, %v247
    %v279 = vcombine.high %v233, %v247
    %v280 = vcombine.low %v254, %v268
    %v281 = vcombine.high %v254, %v268
    %v282 = vcombine.low %v261, %v275
    %v283 = vcombine.high %v261, %v275
    %v285 = vunpack.c.l.s4 1966171168
    %v286 = vunpack.c.0.s8 %v285
    %v287 = vlaneseq
    %v288 = vshrl.u32 %v287, 7
    %v289 = vsub.s32 %v286, %v288
    %v290 = vrot.slane %v276, %v289
    %v292 = vunpack.c.l.s4 1966171168
    %v293 = vunpack.c.0.s8 %v292
    %v294 = vlaneseq
    %v295 = vshrl.u32 %v294, 7
    %v296 = vsub.s32 %v293, %v295
    %v297 = vrot.slane %v278, %v296
    %v299 = vunpack.c.l.s4 1966171168
    %v300 = vunpack.c.0.s8 %v299
    %v301 = vlaneseq
    %v302 = vshrl.u32 %v301, 7
    %v303 = vsub.s32 %v300, %v302
    %v304 = vrot.slane %v277, %v303
    %v306 = vunpack.c.l.s4 1966171168
    %v307 = vunpack.c.0.s8 %v306
    %v308 = vlaneseq
    %v309 = vshrl.u32 %v308, 7
    %v310 = vsub.s32 %v307, %v309
    %v311 = vrot.slane %v279, %v310
    %v313 = vunpack.c.l.s4 1966171168
    %v314 = vunpack.c.0.s8 %v313
    %v315 = vlaneseq
    %v316 = vshrl.u32 %v315, 7
    %v317 = vsub.s32 %v314, %v316
    %v318 = vrot.slane %v280, %v317
    %v320 = vunpack.c.l.s4 1966171168
    %v321 = vunpack.c.0.s8 %v320
    %v322 = vlaneseq
    %v323 = vshrl.u32 %v322, 7
    %v324 = vsub.s32 %v321, %v323
    %v325 = vrot.slane %v282, %v324
    %v327 = vunpack.c.l.s4 1966171168
    %v328 = vunpack.c.0.s8 %v327
    %v329 = vlaneseq
    %v330 = vshrl.u32 %v329, 7
    %v331 = vsub.s32 %v328, %v330
    %v332 = vrot.slane %v281, %v331
    %v334 = vunpack.c.l.s4 1966171168
    %v335 = vunpack.c.0.s8 %v334
    %v336 = vlaneseq
    %v337 = vshrl.u32 %v336, 7
    %v338 = vsub.s32 %v335, %v337
    %v339 = vrot.slane %v283, %v338
    %v340 = vcombine.low %v290, %v318
    %v341 = vcombine.high %v290, %v318
    %v342 = vcombine.low %v297, %v325
    %v343 = vcombine.high %v297, %v325
    %v344 = vcombine.low %v304, %v332
    %v345 = vcombine.high %v304, %v332
    %v346 = vcombine.low %v311, %v339
    %v347 = vcombine.high %v311, %v339
    %v364 = vpack.c.bf16 %v340, %v204
    %v365 = vpack.c.bf16 %v344, %v208
    %v366 = vpack.c.bf16 %v341, %v205
    %v367 = vpack.c.bf16 %v345, %v209
    %v368 = vpack.c.bf16 %v342, %v206
    %v369 = vpack.c.bf16 %v346, %v210
    %v370 = vpack.c.bf16 %v343, %v207
    %v371 = vpack.c.bf16 %v347, %v211
    %v372 = vld [vmem:[#allocation5] sm:$0xff]
    %v373 = vld [vmem:[#allocation5 + $0x8] sm:$0xf]
    %v374 = vld [vmem:[#allocation5 + $0xc] sm:$0xff]
    %v375 = vld [vmem:[#allocation5 + $0x14] sm:$0xf]
    %v376 = vld [vmem:[#allocation5 + $0x18] sm:$0xff]
    %v377 = vld [vmem:[#allocation5 + $0x20] sm:$0xf]
    %v378 = vld [vmem:[#allocation5 + $0x24] sm:$0xff]
    %v379 = vld [vmem:[#allocation5 + $0x2c] sm:$0xf]
    %v380 = vld [vmem:[#allocation5 + $0x30] sm:$0xff]
    %v381 = vld [vmem:[#allocation5 + $0x38] sm:$0xf]
    %v382 = vld [vmem:[#allocation5 + $0x3c] sm:$0xff]
    %v383 = vld [vmem:[#allocation5 + $0x44] sm:$0xf]
    %v384 = vld [vmem:[#allocation5 + $0x48] sm:$0xff]
    %v385 = vld [vmem:[#allocation5 + $0x50] sm:$0xf]
    %v386 = vld [vmem:[#allocation5 + $0x54] sm:$0xff]
    %v387 = vld [vmem:[#allocation5 + $0x5c] sm:$0xf]
    %v388 = vld [vmem:[#allocation5 + $0x60] sm:$0xff]
    %v389 = vld [vmem:[#allocation5 + $0x68] sm:$0xf]
    %v390 = vld [vmem:[#allocation5 + $0x6c] sm:$0xff]
    %v391 = vld [vmem:[#allocation5 + $0x74] sm:$0xf]
    %v392 = vld [vmem:[#allocation5 + $0x78] sm:$0xff]
    %v393 = vld [vmem:[#allocation5 + $0x80] sm:$0xf]
    %v394 = vld [vmem:[#allocation5 + $0x84] sm:$0xff]
    %v395 = vld [vmem:[#allocation5 + $0x8c] sm:$0xf]
    %v396 = vld [vmem:[#allocation5 + $0x90] sm:$0xff]
    %v397 = vld [vmem:[#allocation5 + $0x98] sm:$0xf]
    %v398 = vld [vmem:[#allocation5 + $0x9c] sm:$0xff]
    %v399 = vld [vmem:[#allocation5 + $0xa4] sm:$0xf]
    %v400 = vld [vmem:[#allocation5 + $0xa8] sm:$0xff]
    %v401 = vld [vmem:[#allocation5 + $0xb0] sm:$0xf]
    %v402 = vld [vmem:[#allocation5 + $0xb4] sm:$0xff]
    %v403 = vld [vmem:[#allocation5 + $0xbc] sm:$0xf]
    %v404 = vld [vmem:[#allocation5 + $0xc0] sm:$0xff]
    %v405 = vld [vmem:[#allocation5 + $0xc8] sm:$0xf]
    %v406 = vld [vmem:[#allocation5 + $0xcc] sm:$0xff]
    %v407 = vld [vmem:[#allocation5 + $0xd4] sm:$0xf]
    %v408 = vld [vmem:[#allocation5 + $0xd8] sm:$0xff]
    %v409 = vld [vmem:[#allocation5 + $0xe0] sm:$0xf]
    %v410 = vld [vmem:[#allocation5 + $0xe4] sm:$0xff]
    %v411 = vld [vmem:[#allocation5 + $0xec] sm:$0xf]
    %v412 = vld [vmem:[#allocation5 + $0xf0] sm:$0xff]
    %v413 = vld [vmem:[#allocation5 + $0xf8] sm:$0xf]
    %v414 = vld [vmem:[#allocation5 + $0xfc] sm:$0xff]
    %v415 = vld [vmem:[#allocation5 + $0x104] sm:$0xf]
    %v416 = vld [vmem:[#allocation5 + $0x108] sm:$0xff]
    %v417 = vld [vmem:[#allocation5 + $0x110] sm:$0xf]
    %v418 = vld [vmem:[#allocation5 + $0x114] sm:$0xff]
    %v419 = vld [vmem:[#allocation5 + $0x11c] sm:$0xf]
    %v420 = vld [vmem:[#allocation5 + $0x120] sm:$0xff]
    %v421 = vld [vmem:[#allocation5 + $0x128] sm:$0xf]
    %v422 = vld [vmem:[#allocation5 + $0x12c] sm:$0xff]
    %v423 = vld [vmem:[#allocation5 + $0x134] sm:$0xf]
    %v424 = vld [vmem:[#allocation5 + $0x138] sm:$0xff]
    %v425 = vld [vmem:[#allocation5 + $0x140] sm:$0xf]
    %v426 = vld [vmem:[#allocation5 + $0x144] sm:$0xff]
    %v427 = vld [vmem:[#allocation5 + $0x14c] sm:$0xf]
    %v428 = vld [vmem:[#allocation5 + $0x150] sm:$0xff]
    %v429 = vld [vmem:[#allocation5 + $0x158] sm:$0xf]
    %v430 = vld [vmem:[#allocation5 + $0x15c] sm:$0xff]
    %v431 = vld [vmem:[#allocation5 + $0x164] sm:$0xf]
    %v432 = vld [vmem:[#allocation5 + $0x168] sm:$0xff]
    %v433 = vld [vmem:[#allocation5 + $0x170] sm:$0xf]
    %v434 = vld [vmem:[#allocation5 + $0x174] sm:$0xff]
    %v435 = vld [vmem:[#allocation5 + $0x17c] sm:$0xf]
    %v436 = vld [vmem:[#allocation5 + $0x180] sm:$0xff]
    %v437 = vld [vmem:[#allocation5 + $0x188] sm:$0xf]
    %v438 = vld [vmem:[#allocation5 + $0x18c] sm:$0xff]
    %v439 = vld [vmem:[#allocation5 + $0x194] sm:$0xf]
    %v440 = vld [vmem:[#allocation5 + $0x198] sm:$0xff]
    %v441 = vld [vmem:[#allocation5 + $0x1a0] sm:$0xf]
    %v442 = vld [vmem:[#allocation5 + $0x1a4] sm:$0xff]
    %v443 = vld [vmem:[#allocation5 + $0x1ac] sm:$0xf]
    %v444 = vld [vmem:[#allocation5 + $0x1b0] sm:$0xff]
    %v445 = vld [vmem:[#allocation5 + $0x1b8] sm:$0xf]
    %v446 = vld [vmem:[#allocation5 + $0x1bc] sm:$0xff]
    %v447 = vld [vmem:[#allocation5 + $0x1c4] sm:$0xf]
    %v448 = vld [vmem:[#allocation5 + $0x1c8] sm:$0xff]
    %v449 = vld [vmem:[#allocation5 + $0x1d0] sm:$0xf]
    %v450 = vld [vmem:[#allocation5 + $0x1d4] sm:$0xff]
    %v451 = vld [vmem:[#allocation5 + $0x1dc] sm:$0xf]
    %v452 = vld [vmem:[#allocation5 + $0x1e0] sm:$0xff]
    %v453 = vld [vmem:[#allocation5 + $0x1e8] sm:$0xf]
    %v454 = vld [vmem:[#allocation5 + $0x1ec] sm:$0xff]
    %v455 = vld [vmem:[#allocation5 + $0x1f4] sm:$0xf]
    %v456 = vld [vmem:[#allocation5 + $0x1f8] sm:$0xff]
    %v457 = vld [vmem:[#allocation5 + $0x200] sm:$0xf]
    %v458 = vld [vmem:[#allocation5 + $0x204] sm:$0xff]
    %v459 = vld [vmem:[#allocation5 + $0x20c] sm:$0xf]
    %v460 = vld [vmem:[#allocation5 + $0x210] sm:$0xff]
    %v461 = vld [vmem:[#allocation5 + $0x218] sm:$0xf]
    %v462 = vld [vmem:[#allocation5 + $0x21c] sm:$0xff]
    %v463 = vld [vmem:[#allocation5 + $0x224] sm:$0xf]
    %v464 = vld [vmem:[#allocation5 + $0x228] sm:$0xff]
    %v465 = vld [vmem:[#allocation5 + $0x230] sm:$0xf]
    %v466 = vld [vmem:[#allocation5 + $0x234] sm:$0xff]
    %v467 = vld [vmem:[#allocation5 + $0x23c] sm:$0xf]
    %v468 = vld [vmem:[#allocation5 + $0x240] sm:$0xff]
    %v469 = vld [vmem:[#allocation5 + $0x248] sm:$0xf]
    %v470 = vld [vmem:[#allocation5 + $0x24c] sm:$0xff]
    %v471 = vld [vmem:[#allocation5 + $0x254] sm:$0xf]
    %v472 = vld [vmem:[#allocation5 + $0x258] sm:$0xff]
    %v473 = vld [vmem:[#allocation5 + $0x260] sm:$0xf]
    %v474 = vld [vmem:[#allocation5 + $0x264] sm:$0xff]
    %v475 = vld [vmem:[#allocation5 + $0x26c] sm:$0xf]
    %v476 = vld [vmem:[#allocation5 + $0x270] sm:$0xff]
    %v477 = vld [vmem:[#allocation5 + $0x278] sm:$0xf]
    %v478 = vld [vmem:[#allocation5 + $0x27c] sm:$0xff]
    %v479 = vld [vmem:[#allocation5 + $0x284] sm:$0xf]
    %v480 = vld [vmem:[#allocation5 + $0x288] sm:$0xff]
    %v481 = vld [vmem:[#allocation5 + $0x290] sm:$0xf]
    %v482 = vld [vmem:[#allocation5 + $0x294] sm:$0xff]
    %v483 = vld [vmem:[#allocation5 + $0x29c] sm:$0xf]
    %v484 = vld [vmem:[#allocation5 + $0x2a0] sm:$0xff]
    %v485 = vld [vmem:[#allocation5 + $0x2a8] sm:$0xf]
    %v486 = vld [vmem:[#allocation5 + $0x2ac] sm:$0xff]
    %v487 = vld [vmem:[#allocation5 + $0x2b4] sm:$0xf]
    %v488 = vld [vmem:[#allocation5 + $0x2b8] sm:$0xff]
    %v489 = vld [vmem:[#allocation5 + $0x2c0] sm:$0xf]
    %v490 = vld [vmem:[#allocation5 + $0x2c4] sm:$0xff]
    %v491 = vld [vmem:[#allocation5 + $0x2cc] sm:$0xf]
    %v492 = vld [vmem:[#allocation5 + $0x2d0] sm:$0xff]
    %v493 = vld [vmem:[#allocation5 + $0x2d8] sm:$0xf]
    %v494 = vld [vmem:[#allocation5 + $0x2dc] sm:$0xff]
    %v495 = vld [vmem:[#allocation5 + $0x2e4] sm:$0xf]
    %v496 = vld [vmem:[#allocation5 + $0x2e8] sm:$0xff]
    %v497 = vld [vmem:[#allocation5 + $0x2f0] sm:$0xf]
    %v498 = vld [vmem:[#allocation5 + $0x2f4] sm:$0xff]
    %v499 = vld [vmem:[#allocation5 + $0x2fc] sm:$0xf]
    %v500 = vld [vmem:[#allocation5 + $0x300] sm:$0xff]
    %v501 = vld [vmem:[#allocation5 + $0x308] sm:$0xf]
    %v502 = vld [vmem:[#allocation5 + $0x30c] sm:$0xff]
    %v503 = vld [vmem:[#allocation5 + $0x314] sm:$0xf]
    %v504 = vld [vmem:[#allocation5 + $0x318] sm:$0xff]
    %v505 = vld [vmem:[#allocation5 + $0x320] sm:$0xf]
    %v506 = vld [vmem:[#allocation5 + $0x324] sm:$0xff]
    %v507 = vld [vmem:[#allocation5 + $0x32c] sm:$0xf]
    %v508 = vld [vmem:[#allocation5 + $0x330] sm:$0xff]
    %v509 = vld [vmem:[#allocation5 + $0x338] sm:$0xf]
    %v510 = vld [vmem:[#allocation5 + $0x33c] sm:$0xff]
    %v511 = vld [vmem:[#allocation5 + $0x344] sm:$0xf]
    %v512 = vld [vmem:[#allocation5 + $0x348] sm:$0xff]
    %v513 = vld [vmem:[#allocation5 + $0x350] sm:$0xf]
    %v514 = vld [vmem:[#allocation5 + $0x354] sm:$0xff]
    %v515 = vld [vmem:[#allocation5 + $0x35c] sm:$0xf]
    %v516 = vld [vmem:[#allocation5 + $0x360] sm:$0xff]
    %v517 = vld [vmem:[#allocation5 + $0x368] sm:$0xf]
    %v518 = vld [vmem:[#allocation5 + $0x36c] sm:$0xff]
    %v519 = vld [vmem:[#allocation5 + $0x374] sm:$0xf]
    %v520 = vld [vmem:[#allocation5 + $0x378] sm:$0xff]
    %v521 = vld [vmem:[#allocation5 + $0x380] sm:$0xf]
    %v522 = vld [vmem:[#allocation5 + $0x384] sm:$0xff]
    %v523 = vld [vmem:[#allocation5 + $0x38c] sm:$0xf]
    %v524 = vld [vmem:[#allocation5 + $0x390] sm:$0xff]
    %v525 = vld [vmem:[#allocation5 + $0x398] sm:$0xf]
    %v526 = vld [vmem:[#allocation5 + $0x39c] sm:$0xff]
    %v527 = vld [vmem:[#allocation5 + $0x3a4] sm:$0xf]
    %v528 = vld [vmem:[#allocation5 + $0x3a8] sm:$0xff]
    %v529 = vld [vmem:[#allocation5 + $0x3b0] sm:$0xf]
    %v530 = vld [vmem:[#allocation5 + $0x3b4] sm:$0xff]
    %v531 = vld [vmem:[#allocation5 + $0x3bc] sm:$0xf]
    %v532 = vld [vmem:[#allocation5 + $0x3c0] sm:$0xff]
    %v533 = vld [vmem:[#allocation5 + $0x3c8] sm:$0xf]
    %v534 = vld [vmem:[#allocation5 + $0x3cc] sm:$0xff]
    %v535 = vld [vmem:[#allocation5 + $0x3d4] sm:$0xf]
    %v536 = vld [vmem:[#allocation5 + $0x3d8] sm:$0xff]
    %v537 = vld [vmem:[#allocation5 + $0x3e0] sm:$0xf]
    %v538 = vld [vmem:[#allocation5 + $0x3e4] sm:$0xff]
    %v539 = vld [vmem:[#allocation5 + $0x3ec] sm:$0xf]
    %v540 = vld [vmem:[#allocation5 + $0x3f0] sm:$0xff]
    %v541 = vld [vmem:[#allocation5 + $0x3f8] sm:$0xf]
    %v542 = vld [vmem:[#allocation5 + $0x3fc] sm:$0xff]
    %v543 = vld [vmem:[#allocation5 + $0x404] sm:$0xf]
    %v544 = vld [vmem:[#allocation5 + $0x408] sm:$0xff]
    %v545 = vld [vmem:[#allocation5 + $0x410] sm:$0xf]
    %v546 = vld [vmem:[#allocation5 + $0x414] sm:$0xff]
    %v547 = vld [vmem:[#allocation5 + $0x41c] sm:$0xf]
    %v548 = vld [vmem:[#allocation5 + $0x420] sm:$0xff]
    %v549 = vld [vmem:[#allocation5 + $0x428] sm:$0xf]
    %v550 = vld [vmem:[#allocation5 + $0x42c] sm:$0xff]
    %v551 = vld [vmem:[#allocation5 + $0x434] sm:$0xf]
    %v552 = vld [vmem:[#allocation5 + $0x438] sm:$0xff]
    %v553 = vld [vmem:[#allocation5 + $0x440] sm:$0xf]
    %v554 = vld [vmem:[#allocation5 + $0x444] sm:$0xff]
    %v555 = vld [vmem:[#allocation5 + $0x44c] sm:$0xf]
    %v556 = vld [vmem:[#allocation5 + $0x450] sm:$0xff]
    %v557 = vld [vmem:[#allocation5 + $0x458] sm:$0xf]
    %v558 = vld [vmem:[#allocation5 + $0x45c] sm:$0xff]
    %v559 = vld [vmem:[#allocation5 + $0x464] sm:$0xf]
    %v560 = vld [vmem:[#allocation5 + $0x468] sm:$0xff]
    %v561 = vld [vmem:[#allocation5 + $0x470] sm:$0xf]
    %v562 = vld [vmem:[#allocation5 + $0x474] sm:$0xff]
    %v563 = vld [vmem:[#allocation5 + $0x47c] sm:$0xf]
    %v564 = vld [vmem:[#allocation5 + $0x480] sm:$0xff]
    %v565 = vld [vmem:[#allocation5 + $0x488] sm:$0xf]
    %v566 = vld [vmem:[#allocation5 + $0x48c] sm:$0xff]
    %v567 = vld [vmem:[#allocation5 + $0x494] sm:$0xf]
    %v568 = vld [vmem:[#allocation5 + $0x498] sm:$0xff]
    %v569 = vld [vmem:[#allocation5 + $0x4a0] sm:$0xf]
    %v570 = vld [vmem:[#allocation5 + $0x4a4] sm:$0xff]
    %v571 = vld [vmem:[#allocation5 + $0x4ac] sm:$0xf]
    %v572 = vld [vmem:[#allocation5 + $0x4b0] sm:$0xff]
    %v573 = vld [vmem:[#allocation5 + $0x4b8] sm:$0xf]
    %v574 = vld [vmem:[#allocation5 + $0x4bc] sm:$0xff]
    %v575 = vld [vmem:[#allocation5 + $0x4c4] sm:$0xf]
    %v576 = vld [vmem:[#allocation5 + $0x4c8] sm:$0xff]
    %v577 = vld [vmem:[#allocation5 + $0x4d0] sm:$0xf]
    %v578 = vld [vmem:[#allocation5 + $0x4d4] sm:$0xff]
    %v579 = vld [vmem:[#allocation5 + $0x4dc] sm:$0xf]
    %v580 = vld [vmem:[#allocation5 + $0x4e0] sm:$0xff]
    %v581 = vld [vmem:[#allocation5 + $0x4e8] sm:$0xf]
    %v582 = vld [vmem:[#allocation5 + $0x4ec] sm:$0xff]
    %v583 = vld [vmem:[#allocation5 + $0x4f4] sm:$0xf]
    %v584 = vld [vmem:[#allocation5 + $0x4f8] sm:$0xff]
    %v585 = vld [vmem:[#allocation5 + $0x500] sm:$0xf]
    %v586 = vld [vmem:[#allocation5 + $0x504] sm:$0xff]
    %v587 = vld [vmem:[#allocation5 + $0x50c] sm:$0xf]
    %v588 = vld [vmem:[#allocation5 + $0x510] sm:$0xff]
    %v589 = vld [vmem:[#allocation5 + $0x518] sm:$0xf]
    %v590 = vld [vmem:[#allocation5 + $0x51c] sm:$0xff]
    %v591 = vld [vmem:[#allocation5 + $0x524] sm:$0xf]
    %v592 = vld [vmem:[#allocation5 + $0x528] sm:$0xff]
    %v593 = vld [vmem:[#allocation5 + $0x530] sm:$0xf]
    %v594 = vld [vmem:[#allocation5 + $0x534] sm:$0xff]
    %v595 = vld [vmem:[#allocation5 + $0x53c] sm:$0xf]
    %v596 = vld [vmem:[#allocation5 + $0x540] sm:$0xff]
    %v597 = vld [vmem:[#allocation5 + $0x548] sm:$0xf]
    %v598 = vld [vmem:[#allocation5 + $0x54c] sm:$0xff]
    %v599 = vld [vmem:[#allocation5 + $0x554] sm:$0xf]
    %v600 = vld [vmem:[#allocation5 + $0x558] sm:$0xff]
    %v601 = vld [vmem:[#allocation5 + $0x560] sm:$0xf]
    %v602 = vld [vmem:[#allocation5 + $0x564] sm:$0xff]
    %v603 = vld [vmem:[#allocation5 + $0x56c] sm:$0xf]
    %v604 = vld [vmem:[#allocation5 + $0x570] sm:$0xff]
    %v605 = vld [vmem:[#allocation5 + $0x578] sm:$0xf]
    %v606 = vld [vmem:[#allocation5 + $0x57c] sm:$0xff]
    %v607 = vld [vmem:[#allocation5 + $0x584] sm:$0xf]
    %v608 = vld [vmem:[#allocation5 + $0x588] sm:$0xff]
    %v609 = vld [vmem:[#allocation5 + $0x590] sm:$0xf]
    %v610 = vld [vmem:[#allocation5 + $0x594] sm:$0xff]
    %v611 = vld [vmem:[#allocation5 + $0x59c] sm:$0xf]
    %v612 = vld [vmem:[#allocation5 + $0x5a0] sm:$0xff]
    %v613 = vld [vmem:[#allocation5 + $0x5a8] sm:$0xf]
    %v614 = vld [vmem:[#allocation5 + $0x5ac] sm:$0xff]
    %v615 = vld [vmem:[#allocation5 + $0x5b4] sm:$0xf]
    %v616 = vld [vmem:[#allocation5 + $0x5b8] sm:$0xff]
    %v617 = vld [vmem:[#allocation5 + $0x5c0] sm:$0xf]
    %v618 = vld [vmem:[#allocation5 + $0x5c4] sm:$0xff]
    %v619 = vld [vmem:[#allocation5 + $0x5cc] sm:$0xf]
    %v620 = vld [vmem:[#allocation5 + $0x5d0] sm:$0xff]
    %v621 = vld [vmem:[#allocation5 + $0x5d8] sm:$0xf]
    %v622 = vld [vmem:[#allocation5 + $0x5dc] sm:$0xff]
    %v623 = vld [vmem:[#allocation5 + $0x5e4] sm:$0xf]
    %v624 = vld [vmem:[#allocation5 + $0x5e8] sm:$0xff]
    %v625 = vld [vmem:[#allocation5 + $0x5f0] sm:$0xf]
    %v626 = vld [vmem:[#allocation5 + $0x5f4] sm:$0xff]
    %v627 = vld [vmem:[#allocation5 + $0x5fc] sm:$0xf]
    %v628 = vld [vmem:[%s2] sm:$0x7]
    %v630 = vlaneseq
    %v631 = vshrl.u32 %v630, 7
    %v632 = vsub.s32 0, %v631
    %v633 = vrot.slane %v628, %v632
    %v634 = vlaneseq
    %v635 = vshrl.u32 %v634, 7
    %v636 = vsub.s32 1, %v635
    %v637 = vrot.slane %v628, %v636
    %v638 = vlaneseq
    %v639 = vshrl.u32 %v638, 7
    %v640 = vsub.s32 2, %v639
    %v641 = vrot.slane %v628, %v640
    %v901 = vunpack.c.l.b16 %v372
    %v902 = vunpack.c.h.b16 %v372
    %v903 = vunpack.c.l.b16 %v373
    %v904 = vunpack.c.l.b16 %v374
    %v905 = vunpack.c.h.b16 %v374
    %v906 = vunpack.c.l.b16 %v375
    %v907 = vunpack.c.l.b16 %v376
    %v908 = vunpack.c.h.b16 %v376
    %v909 = vunpack.c.l.b16 %v377
    %v910 = vunpack.c.l.b16 %v378
    %v911 = vunpack.c.h.b16 %v378
    %v912 = vunpack.c.l.b16 %v379
    %v913 = vunpack.c.l.b16 %v380
    %v914 = vunpack.c.h.b16 %v380
    %v915 = vunpack.c.l.b16 %v381
    %v916 = vunpack.c.l.b16 %v382
    %v917 = vunpack.c.h.b16 %v382
    %v918 = vunpack.c.l.b16 %v383
    %v919 = vunpack.c.l.b16 %v384
    %v920 = vunpack.c.h.b16 %v384
    %v921 = vunpack.c.l.b16 %v385
    %v922 = vunpack.c.l.b16 %v386
    %v923 = vunpack.c.h.b16 %v386
    %v924 = vunpack.c.l.b16 %v387
    %v925 = vunpack.c.l.b16 %v388
    %v926 = vunpack.c.h.b16 %v388
    %v927 = vunpack.c.l.b16 %v389
    %v928 = vunpack.c.l.b16 %v390
    %v929 = vunpack.c.h.b16 %v390
    %v930 = vunpack.c.l.b16 %v391
    %v931 = vunpack.c.l.b16 %v392
    %v932 = vunpack.c.h.b16 %v392
    %v933 = vunpack.c.l.b16 %v393
    %v934 = vunpack.c.l.b16 %v394
    %v935 = vunpack.c.h.b16 %v394
    %v936 = vunpack.c.l.b16 %v395
    %v937 = vunpack.c.l.b16 %v396
    %v938 = vunpack.c.h.b16 %v396
    %v939 = vunpack.c.l.b16 %v397
    %v940 = vunpack.c.l.b16 %v398
    %v941 = vunpack.c.h.b16 %v398
    %v942 = vunpack.c.l.b16 %v399
    %v943 = vunpack.c.l.b16 %v400
    %v944 = vunpack.c.h.b16 %v400
    %v945 = vunpack.c.l.b16 %v401
    %v946 = vunpack.c.l.b16 %v402
    %v947 = vunpack.c.h.b16 %v402
    %v948 = vunpack.c.l.b16 %v403
    %v949 = vunpack.c.l.b16 %v404
    %v950 = vunpack.c.h.b16 %v404
    %v951 = vunpack.c.l.b16 %v405
    %v952 = vunpack.c.l.b16 %v406
    %v953 = vunpack.c.h.b16 %v406
    %v954 = vunpack.c.l.b16 %v407
    %v955 = vunpack.c.l.b16 %v408
    %v956 = vunpack.c.h.b16 %v408
    %v957 = vunpack.c.l.b16 %v409
    %v958 = vunpack.c.l.b16 %v410
    %v959 = vunpack.c.h.b16 %v410
    %v960 = vunpack.c.l.b16 %v411
    %v961 = vunpack.c.l.b16 %v412
    %v962 = vunpack.c.h.b16 %v412
    %v963 = vunpack.c.l.b16 %v413
    %v964 = vunpack.c.l.b16 %v414
    %v965 = vunpack.c.h.b16 %v414
    %v966 = vunpack.c.l.b16 %v415
    %v967 = vunpack.c.l.b16 %v416
    %v968 = vunpack.c.h.b16 %v416
    %v969 = vunpack.c.l.b16 %v417
    %v970 = vunpack.c.l.b16 %v418
    %v971 = vunpack.c.h.b16 %v418
    %v972 = vunpack.c.l.b16 %v419
    %v973 = vunpack.c.l.b16 %v420
    %v974 = vunpack.c.h.b16 %v420
    %v975 = vunpack.c.l.b16 %v421
    %v976 = vunpack.c.l.b16 %v422
    %v977 = vunpack.c.h.b16 %v422
    %v978 = vunpack.c.l.b16 %v423
    %v979 = vunpack.c.l.b16 %v424
    %v980 = vunpack.c.h.b16 %v424
    %v981 = vunpack.c.l.b16 %v425
    %v982 = vunpack.c.l.b16 %v426
    %v983 = vunpack.c.h.b16 %v426
    %v984 = vunpack.c.l.b16 %v427
    %v985 = vunpack.c.l.b16 %v428
    %v986 = vunpack.c.h.b16 %v428
    %v987 = vunpack.c.l.b16 %v429
    %v988 = vunpack.c.l.b16 %v430
    %v989 = vunpack.c.h.b16 %v430
    %v990 = vunpack.c.l.b16 %v431
    %v991 = vunpack.c.l.b16 %v432
    %v992 = vunpack.c.h.b16 %v432
    %v993 = vunpack.c.l.b16 %v433
    %v994 = vunpack.c.l.b16 %v434
    %v995 = vunpack.c.h.b16 %v434
    %v996 = vunpack.c.l.b16 %v435
    %v997 = vunpack.c.l.b16 %v436
    %v998 = vunpack.c.h.b16 %v436
    %v999 = vunpack.c.l.b16 %v437
    %v1000 = vunpack.c.l.b16 %v438
    %v1001 = vunpack.c.h.b16 %v438
    %v1002 = vunpack.c.l.b16 %v439
    %v1003 = vunpack.c.l.b16 %v440
    %v1004 = vunpack.c.h.b16 %v440
    %v1005 = vunpack.c.l.b16 %v441
    %v1006 = vunpack.c.l.b16 %v442
    %v1007 = vunpack.c.h.b16 %v442
    %v1008 = vunpack.c.l.b16 %v443
    %v1009 = vunpack.c.l.b16 %v444
    %v1010 = vunpack.c.h.b16 %v444
    %v1011 = vunpack.c.l.b16 %v445
    %v1012 = vunpack.c.l.b16 %v446
    %v1013 = vunpack.c.h.b16 %v446
    %v1014 = vunpack.c.l.b16 %v447
    %v1015 = vunpack.c.l.b16 %v448
    %v1016 = vunpack.c.h.b16 %v448
    %v1017 = vunpack.c.l.b16 %v449
    %v1018 = vunpack.c.l.b16 %v450
    %v1019 = vunpack.c.h.b16 %v450
    %v1020 = vunpack.c.l.b16 %v451
    %v1021 = vunpack.c.l.b16 %v452
    %v1022 = vunpack.c.h.b16 %v452
    %v1023 = vunpack.c.l.b16 %v453
    %v1024 = vunpack.c.l.b16 %v454
    %v1025 = vunpack.c.h.b16 %v454
    %v1026 = vunpack.c.l.b16 %v455
    %v1027 = vunpack.c.l.b16 %v456
    %v1028 = vunpack.c.h.b16 %v456
    %v1029 = vunpack.c.l.b16 %v457
    %v1030 = vunpack.c.l.b16 %v458
    %v1031 = vunpack.c.h.b16 %v458
    %v1032 = vunpack.c.l.b16 %v459
    %v1033 = vunpack.c.l.b16 %v460
    %v1034 = vunpack.c.h.b16 %v460
    %v1035 = vunpack.c.l.b16 %v461
    %v1036 = vunpack.c.l.b16 %v462
    %v1037 = vunpack.c.h.b16 %v462
    %v1038 = vunpack.c.l.b16 %v463
    %v1039 = vunpack.c.l.b16 %v464
    %v1040 = vunpack.c.h.b16 %v464
    %v1041 = vunpack.c.l.b16 %v465
    %v1042 = vunpack.c.l.b16 %v466
    %v1043 = vunpack.c.h.b16 %v466
    %v1044 = vunpack.c.l.b16 %v467
    %v1045 = vunpack.c.l.b16 %v468
    %v1046 = vunpack.c.h.b16 %v468
    %v1047 = vunpack.c.l.b16 %v469
    %v1048 = vunpack.c.l.b16 %v470
    %v1049 = vunpack.c.h.b16 %v470
    %v1050 = vunpack.c.l.b16 %v471
    %v1051 = vunpack.c.l.b16 %v472
    %v1052 = vunpack.c.h.b16 %v472
    %v1053 = vunpack.c.l.b16 %v473
    %v1054 = vunpack.c.l.b16 %v474
    %v1055 = vunpack.c.h.b16 %v474
    %v1056 = vunpack.c.l.b16 %v475
    %v1057 = vunpack.c.l.b16 %v476
    %v1058 = vunpack.c.h.b16 %v476
    %v1059 = vunpack.c.l.b16 %v477
    %v1060 = vunpack.c.l.b16 %v478
    %v1061 = vunpack.c.h.b16 %v478
    %v1062 = vunpack.c.l.b16 %v479
    %v1063 = vunpack.c.l.b16 %v480
    %v1064 = vunpack.c.h.b16 %v480
    %v1065 = vunpack.c.l.b16 %v481
    %v1066 = vunpack.c.l.b16 %v482
    %v1067 = vunpack.c.h.b16 %v482
    %v1068 = vunpack.c.l.b16 %v483
    %v1069 = vunpack.c.l.b16 %v484
    %v1070 = vunpack.c.h.b16 %v484
    %v1071 = vunpack.c.l.b16 %v485
    %v1072 = vunpack.c.l.b16 %v486
    %v1073 = vunpack.c.h.b16 %v486
    %v1074 = vunpack.c.l.b16 %v487
    %v1075 = vunpack.c.l.b16 %v488
    %v1076 = vunpack.c.h.b16 %v488
    %v1077 = vunpack.c.l.b16 %v489
    %v1078 = vunpack.c.l.b16 %v490
    %v1079 = vunpack.c.h.b16 %v490
    %v1080 = vunpack.c.l.b16 %v491
    %v1081 = vunpack.c.l.b16 %v492
    %v1082 = vunpack.c.h.b16 %v492
    %v1083 = vunpack.c.l.b16 %v493
    %v1084 = vunpack.c.l.b16 %v494
    %v1085 = vunpack.c.h.b16 %v494
    %v1086 = vunpack.c.l.b16 %v495
    %v1087 = vunpack.c.l.b16 %v496
    %v1088 = vunpack.c.h.b16 %v496
    %v1089 = vunpack.c.l.b16 %v497
    %v1090 = vunpack.c.l.b16 %v498
    %v1091 = vunpack.c.h.b16 %v498
    %v1092 = vunpack.c.l.b16 %v499
    %v1093 = vunpack.c.l.b16 %v500
    %v1094 = vunpack.c.h.b16 %v500
    %v1095 = vunpack.c.l.b16 %v501
    %v1096 = vunpack.c.l.b16 %v502
    %v1097 = vunpack.c.h.b16 %v502
    %v1098 = vunpack.c.l.b16 %v503
    %v1099 = vunpack.c.l.b16 %v504
    %v1100 = vunpack.c.h.b16 %v504
    %v1101 = vunpack.c.l.b16 %v505
    %v1102 = vunpack.c.l.b16 %v506
    %v1103 = vunpack.c.h.b16 %v506
    %v1104 = vunpack.c.l.b16 %v507
    %v1105 = vunpack.c.l.b16 %v508
    %v1106 = vunpack.c.h.b16 %v508
    %v1107 = vunpack.c.l.b16 %v509
    %v1108 = vunpack.c.l.b16 %v510
    %v1109 = vunpack.c.h.b16 %v510
    %v1110 = vunpack.c.l.b16 %v511
    %v1111 = vunpack.c.l.b16 %v512
    %v1112 = vunpack.c.h.b16 %v512
    %v1113 = vunpack.c.l.b16 %v513
    %v1114 = vunpack.c.l.b16 %v514
    %v1115 = vunpack.c.h.b16 %v514
    %v1116 = vunpack.c.l.b16 %v515
    %v1117 = vunpack.c.l.b16 %v516
    %v1118 = vunpack.c.h.b16 %v516
    %v1119 = vunpack.c.l.b16 %v517
    %v1120 = vunpack.c.l.b16 %v518
    %v1121 = vunpack.c.h.b16 %v518
    %v1122 = vunpack.c.l.b16 %v519
    %v1123 = vunpack.c.l.b16 %v520
    %v1124 = vunpack.c.h.b16 %v520
    %v1125 = vunpack.c.l.b16 %v521
    %v1126 = vunpack.c.l.b16 %v522
    %v1127 = vunpack.c.h.b16 %v522
    %v1128 = vunpack.c.l.b16 %v523
    %v1129 = vunpack.c.l.b16 %v524
    %v1130 = vunpack.c.h.b16 %v524
    %v1131 = vunpack.c.l.b16 %v525
    %v1132 = vunpack.c.l.b16 %v526
    %v1133 = vunpack.c.h.b16 %v526
    %v1134 = vunpack.c.l.b16 %v527
    %v1135 = vunpack.c.l.b16 %v528
    %v1136 = vunpack.c.h.b16 %v528
    %v1137 = vunpack.c.l.b16 %v529
    %v1138 = vunpack.c.l.b16 %v530
    %v1139 = vunpack.c.h.b16 %v530
    %v1140 = vunpack.c.l.b16 %v531
    %v1141 = vunpack.c.l.b16 %v532
    %v1142 = vunpack.c.h.b16 %v532
    %v1143 = vunpack.c.l.b16 %v533
    %v1144 = vunpack.c.l.b16 %v534
    %v1145 = vunpack.c.h.b16 %v534
    %v1146 = vunpack.c.l.b16 %v535
    %v1147 = vunpack.c.l.b16 %v536
    %v1148 = vunpack.c.h.b16 %v536
    %v1149 = vunpack.c.l.b16 %v537
    %v1150 = vunpack.c.l.b16 %v538
    %v1151 = vunpack.c.h.b16 %v538
    %v1152 = vunpack.c.l.b16 %v539
    %v1153 = vunpack.c.l.b16 %v540
    %v1154 = vunpack.c.h.b16 %v540
    %v1155 = vunpack.c.l.b16 %v541
    %v1156 = vunpack.c.l.b16 %v542
    %v1157 = vunpack.c.h.b16 %v542
    %v1158 = vunpack.c.l.b16 %v543
    %v1159 = vunpack.c.l.b16 %v544
    %v1160 = vunpack.c.h.b16 %v544
    %v1161 = vunpack.c.l.b16 %v545
    %v1162 = vunpack.c.l.b16 %v546
    %v1163 = vunpack.c.h.b16 %v546
    %v1164 = vunpack.c.l.b16 %v547
    %v1165 = vunpack.c.l.b16 %v548
    %v1166 = vunpack.c.h.b16 %v548
    %v1167 = vunpack.c.l.b16 %v549
    %v1168 = vunpack.c.l.b16 %v550
    %v1169 = vunpack.c.h.b16 %v550
    %v1170 = vunpack.c.l.b16 %v551
    %v1171 = vunpack.c.l.b16 %v552
    %v1172 = vunpack.c.h.b16 %v552
    %v1173 = vunpack.c.l.b16 %v553
    %v1174 = vunpack.c.l.b16 %v554
    %v1175 = vunpack.c.h.b16 %v554
    %v1176 = vunpack.c.l.b16 %v555
    %v1177 = vunpack.c.l.b16 %v556
    %v1178 = vunpack.c.h.b16 %v556
    %v1179 = vunpack.c.l.b16 %v557
    %v1180 = vunpack.c.l.b16 %v558
    %v1181 = vunpack.c.h.b16 %v558
    %v1182 = vunpack.c.l.b16 %v559
    %v1183 = vunpack.c.l.b16 %v560
    %v1184 = vunpack.c.h.b16 %v560
    %v1185 = vunpack.c.l.b16 %v561
    %v1186 = vunpack.c.l.b16 %v562
    %v1187 = vunpack.c.h.b16 %v562
    %v1188 = vunpack.c.l.b16 %v563
    %v1189 = vunpack.c.l.b16 %v564
    %v1190 = vunpack.c.h.b16 %v564
    %v1191 = vunpack.c.l.b16 %v565
    %v1192 = vunpack.c.l.b16 %v566
    %v1193 = vunpack.c.h.b16 %v566
    %v1194 = vunpack.c.l.b16 %v567
    %v1195 = vunpack.c.l.b16 %v568
    %v1196 = vunpack.c.h.b16 %v568
    %v1197 = vunpack.c.l.b16 %v569
    %v1198 = vunpack.c.l.b16 %v570
    %v1199 = vunpack.c.h.b16 %v570
    %v1200 = vunpack.c.l.b16 %v571
    %v1201 = vunpack.c.l.b16 %v572
    %v1202 = vunpack.c.h.b16 %v572
    %v1203 = vunpack.c.l.b16 %v573
    %v1204 = vunpack.c.l.b16 %v574
    %v1205 = vunpack.c.h.b16 %v574
    %v1206 = vunpack.c.l.b16 %v575
    %v1207 = vunpack.c.l.b16 %v576
    %v1208 = vunpack.c.h.b16 %v576
    %v1209 = vunpack.c.l.b16 %v577
    %v1210 = vunpack.c.l.b16 %v578
    %v1211 = vunpack.c.h.b16 %v578
    %v1212 = vunpack.c.l.b16 %v579
    %v1213 = vunpack.c.l.b16 %v580
    %v1214 = vunpack.c.h.b16 %v580
    %v1215 = vunpack.c.l.b16 %v581
    %v1216 = vunpack.c.l.b16 %v582
    %v1217 = vunpack.c.h.b16 %v582
    %v1218 = vunpack.c.l.b16 %v583
    %v1219 = vunpack.c.l.b16 %v584
    %v1220 = vunpack.c.h.b16 %v584
    %v1221 = vunpack.c.l.b16 %v585
    %v1222 = vunpack.c.l.b16 %v586
    %v1223 = vunpack.c.h.b16 %v586
    %v1224 = vunpack.c.l.b16 %v587
    %v1225 = vunpack.c.l.b16 %v588
    %v1226 = vunpack.c.h.b16 %v588
    %v1227 = vunpack.c.l.b16 %v589
    %v1228 = vunpack.c.l.b16 %v590
    %v1229 = vunpack.c.h.b16 %v590
    %v1230 = vunpack.c.l.b16 %v591
    %v1231 = vunpack.c.l.b16 %v592
    %v1232 = vunpack.c.h.b16 %v592
    %v1233 = vunpack.c.l.b16 %v593
    %v1234 = vunpack.c.l.b16 %v594
    %v1235 = vunpack.c.h.b16 %v594
    %v1236 = vunpack.c.l.b16 %v595
    %v1237 = vunpack.c.l.b16 %v596
    %v1238 = vunpack.c.h.b16 %v596
    %v1239 = vunpack.c.l.b16 %v597
    %v1240 = vunpack.c.l.b16 %v598
    %v1241 = vunpack.c.h.b16 %v598
    %v1242 = vunpack.c.l.b16 %v599
    %v1243 = vunpack.c.l.b16 %v600
    %v1244 = vunpack.c.h.b16 %v600
    %v1245 = vunpack.c.l.b16 %v601
    %v1246 = vunpack.c.l.b16 %v602
    %v1247 = vunpack.c.h.b16 %v602
    %v1248 = vunpack.c.l.b16 %v603
    %v1249 = vunpack.c.l.b16 %v604
    %v1250 = vunpack.c.h.b16 %v604
    %v1251 = vunpack.c.l.b16 %v605
    %v1252 = vunpack.c.l.b16 %v606
    %v1253 = vunpack.c.h.b16 %v606
    %v1254 = vunpack.c.l.b16 %v607
    %v1255 = vunpack.c.l.b16 %v608
    %v1256 = vunpack.c.h.b16 %v608
    %v1257 = vunpack.c.l.b16 %v609
    %v1258 = vunpack.c.l.b16 %v610
    %v1259 = vunpack.c.h.b16 %v610
    %v1260 = vunpack.c.l.b16 %v611
    %v1261 = vunpack.c.l.b16 %v612
    %v1262 = vunpack.c.h.b16 %v612
    %v1263 = vunpack.c.l.b16 %v613
    %v1264 = vunpack.c.l.b16 %v614
    %v1265 = vunpack.c.h.b16 %v614
    %v1266 = vunpack.c.l.b16 %v615
    %v1267 = vunpack.c.l.b16 %v616
    %v1268 = vunpack.c.h.b16 %v616
    %v1269 = vunpack.c.l.b16 %v617
    %v1270 = vunpack.c.l.b16 %v618
    %v1271 = vunpack.c.h.b16 %v618
    %v1272 = vunpack.c.l.b16 %v619
    %v1273 = vunpack.c.l.b16 %v620
    %v1274 = vunpack.c.h.b16 %v620
    %v1275 = vunpack.c.l.b16 %v621
    %v1276 = vunpack.c.l.b16 %v622
    %v1277 = vunpack.c.h.b16 %v622
    %v1278 = vunpack.c.l.b16 %v623
    %v1279 = vunpack.c.l.b16 %v624
    %v1280 = vunpack.c.h.b16 %v624
    %v1281 = vunpack.c.l.b16 %v625
    %v1282 = vunpack.c.l.b16 %v626
    %v1283 = vunpack.c.h.b16 %v626
    %v1284 = vunpack.c.l.b16 %v627
    %v1285 = vpack.c.b16 %v904, %v901
    %v1286 = vpack.c.b16 %v905, %v902
    %v1287 = vpack.c.b16 %v906, %v903
    %v1288 = vpack.c.b16 %v910, %v907
    %v1289 = vpack.c.b16 %v911, %v908
    %v1290 = vpack.c.b16 %v912, %v909
    %v1291 = vpack.c.b16 %v916, %v913
    %v1292 = vpack.c.b16 %v917, %v914
    %v1293 = vpack.c.b16 %v918, %v915
    %v1294 = vpack.c.b16 %v922, %v919
    %v1295 = vpack.c.b16 %v923, %v920
    %v1296 = vpack.c.b16 %v924, %v921
    %v1297 = vpack.c.b16 %v928, %v925
    %v1298 = vpack.c.b16 %v929, %v926
    %v1299 = vpack.c.b16 %v930, %v927
    %v1300 = vpack.c.b16 %v934, %v931
    %v1301 = vpack.c.b16 %v935, %v932
    %v1302 = vpack.c.b16 %v936, %v933
    %v1303 = vpack.c.b16 %v940, %v937
    %v1304 = vpack.c.b16 %v941, %v938
    %v1305 = vpack.c.b16 %v942, %v939
    %v1306 = vpack.c.b16 %v946, %v943
    %v1307 = vpack.c.b16 %v947, %v944
    %v1308 = vpack.c.b16 %v948, %v945
    %v1309 = vpack.c.b16 %v952, %v949
    %v1310 = vpack.c.b16 %v953, %v950
    %v1311 = vpack.c.b16 %v954, %v951
    %v1312 = vpack.c.b16 %v958, %v955
    %v1313 = vpack.c.b16 %v959, %v956
    %v1314 = vpack.c.b16 %v960, %v957
    %v1315 = vpack.c.b16 %v964, %v961
    %v1316 = vpack.c.b16 %v965, %v962
    %v1317 = vpack.c.b16 %v966, %v963
    %v1318 = vpack.c.b16 %v970, %v967
    %v1319 = vpack.c.b16 %v971, %v968
    %v1320 = vpack.c.b16 %v972, %v969
    %v1321 = vpack.c.b16 %v976, %v973
    %v1322 = vpack.c.b16 %v977, %v974
    %v1323 = vpack.c.b16 %v978, %v975
    %v1324 = vpack.c.b16 %v982, %v979
    %v1325 = vpack.c.b16 %v983, %v980
    %v1326 = vpack.c.b16 %v984, %v981
    %v1327 = vpack.c.b16 %v988, %v985
    %v1328 = vpack.c.b16 %v989, %v986
    %v1329 = vpack.c.b16 %v990, %v987
    %v1330 = vpack.c.b16 %v994, %v991
    %v1331 = vpack.c.b16 %v995, %v992
    %v1332 = vpack.c.b16 %v996, %v993
    %v1333 = vpack.c.b16 %v1000, %v997
    %v1334 = vpack.c.b16 %v1001, %v998
    %v1335 = vpack.c.b16 %v1002, %v999
    %v1336 = vpack.c.b16 %v1006, %v1003
    %v1337 = vpack.c.b16 %v1007, %v1004
    %v1338 = vpack.c.b16 %v1008, %v1005
    %v1339 = vpack.c.b16 %v1012, %v1009
    %v1340 = vpack.c.b16 %v1013, %v1010
    %v1341 = vpack.c.b16 %v1014, %v1011
    %v1342 = vpack.c.b16 %v1018, %v1015
    %v1343 = vpack.c.b16 %v1019, %v1016
    %v1344 = vpack.c.b16 %v1020, %v1017
    %v1345 = vpack.c.b16 %v1024, %v1021
    %v1346 = vpack.c.b16 %v1025, %v1022
    %v1347 = vpack.c.b16 %v1026, %v1023
    %v1348 = vpack.c.b16 %v1030, %v1027
    %v1349 = vpack.c.b16 %v1031, %v1028
    %v1350 = vpack.c.b16 %v1032, %v1029
    %v1351 = vpack.c.b16 %v1036, %v1033
    %v1352 = vpack.c.b16 %v1037, %v1034
    %v1353 = vpack.c.b16 %v1038, %v1035
    %v1354 = vpack.c.b16 %v1042, %v1039
    %v1355 = vpack.c.b16 %v1043, %v1040
    %v1356 = vpack.c.b16 %v1044, %v1041
    %v1357 = vpack.c.b16 %v1048, %v1045
    %v1358 = vpack.c.b16 %v1049, %v1046
    %v1359 = vpack.c.b16 %v1050, %v1047
    %v1360 = vpack.c.b16 %v1054, %v1051
    %v1361 = vpack.c.b16 %v1055, %v1052
    %v1362 = vpack.c.b16 %v1056, %v1053
    %v1363 = vpack.c.b16 %v1060, %v1057
    %v1364 = vpack.c.b16 %v1061, %v1058
    %v1365 = vpack.c.b16 %v1062, %v1059
    %v1366 = vpack.c.b16 %v1066, %v1063
    %v1367 = vpack.c.b16 %v1067, %v1064
    %v1368 = vpack.c.b16 %v1068, %v1065
    %v1369 = vpack.c.b16 %v1072, %v1069
    %v1370 = vpack.c.b16 %v1073, %v1070
    %v1371 = vpack.c.b16 %v1074, %v1071
    %v1372 = vpack.c.b16 %v1078, %v1075
    %v1373 = vpack.c.b16 %v1079, %v1076
    %v1374 = vpack.c.b16 %v1080, %v1077
    %v1375 = vpack.c.b16 %v1084, %v1081
    %v1376 = vpack.c.b16 %v1085, %v1082
    %v1377 = vpack.c.b16 %v1086, %v1083
    %v1378 = vpack.c.b16 %v1090, %v1087
    %v1379 = vpack.c.b16 %v1091, %v1088
    %v1380 = vpack.c.b16 %v1092, %v1089
    %v1381 = vpack.c.b16 %v1096, %v1093
    %v1382 = vpack.c.b16 %v1097, %v1094
    %v1383 = vpack.c.b16 %v1098, %v1095
    %v1384 = vpack.c.b16 %v1102, %v1099
    %v1385 = vpack.c.b16 %v1103, %v1100
    %v1386 = vpack.c.b16 %v1104, %v1101
    %v1387 = vpack.c.b16 %v1108, %v1105
    %v1388 = vpack.c.b16 %v1109, %v1106
    %v1389 = vpack.c.b16 %v1110, %v1107
    %v1390 = vpack.c.b16 %v1114, %v1111
    %v1391 = vpack.c.b16 %v1115, %v1112
    %v1392 = vpack.c.b16 %v1116, %v1113
    %v1393 = vpack.c.b16 %v1120, %v1117
    %v1394 = vpack.c.b16 %v1121, %v1118
    %v1395 = vpack.c.b16 %v1122, %v1119
    %v1396 = vpack.c.b16 %v1126, %v1123
    %v1397 = vpack.c.b16 %v1127, %v1124
    %v1398 = vpack.c.b16 %v1128, %v1125
    %v1399 = vpack.c.b16 %v1132, %v1129
    %v1400 = vpack.c.b16 %v1133, %v1130
    %v1401 = vpack.c.b16 %v1134, %v1131
    %v1402 = vpack.c.b16 %v1138, %v1135
    %v1403 = vpack.c.b16 %v1139, %v1136
    %v1404 = vpack.c.b16 %v1140, %v1137
    %v1405 = vpack.c.b16 %v1144, %v1141
    %v1406 = vpack.c.b16 %v1145, %v1142
    %v1407 = vpack.c.b16 %v1146, %v1143
    %v1408 = vpack.c.b16 %v1150, %v1147
    %v1409 = vpack.c.b16 %v1151, %v1148
    %v1410 = vpack.c.b16 %v1152, %v1149
    %v1411 = vpack.c.b16 %v1156, %v1153
    %v1412 = vpack.c.b16 %v1157, %v1154
    %v1413 = vpack.c.b16 %v1158, %v1155
    %v1414 = vpack.c.b16 %v1162, %v1159
    %v1415 = vpack.c.b16 %v1163, %v1160
    %v1416 = vpack.c.b16 %v1164, %v1161
    %v1417 = vpack.c.b16 %v1168, %v1165
    %v1418 = vpack.c.b16 %v1169, %v1166
    %v1419 = vpack.c.b16 %v1170, %v1167
    %v1420 = vpack.c.b16 %v1174, %v1171
    %v1421 = vpack.c.b16 %v1175, %v1172
    %v1422 = vpack.c.b16 %v1176, %v1173
    %v1423 = vpack.c.b16 %v1180, %v1177
    %v1424 = vpack.c.b16 %v1181, %v1178
    %v1425 = vpack.c.b16 %v1182, %v1179
    %v1426 = vpack.c.b16 %v1186, %v1183
    %v1427 = vpack.c.b16 %v1187, %v1184
    %v1428 = vpack.c.b16 %v1188, %v1185
    %v1429 = vpack.c.b16 %v1192, %v1189
    %v1430 = vpack.c.b16 %v1193, %v1190
    %v1431 = vpack.c.b16 %v1194, %v1191
    %v1432 = vpack.c.b16 %v1198, %v1195
    %v1433 = vpack.c.b16 %v1199, %v1196
    %v1434 = vpack.c.b16 %v1200, %v1197
    %v1435 = vpack.c.b16 %v1204, %v1201
    %v1436 = vpack.c.b16 %v1205, %v1202
    %v1437 = vpack.c.b16 %v1206, %v1203
    %v1438 = vpack.c.b16 %v1210, %v1207
    %v1439 = vpack.c.b16 %v1211, %v1208
    %v1440 = vpack.c.b16 %v1212, %v1209
    %v1441 = vpack.c.b16 %v1216, %v1213
    %v1442 = vpack.c.b16 %v1217, %v1214
    %v1443 = vpack.c.b16 %v1218, %v1215
    %v1444 = vpack.c.b16 %v1222, %v1219
    %v1445 = vpack.c.b16 %v1223, %v1220
    %v1446 = vpack.c.b16 %v1224, %v1221
    %v1447 = vpack.c.b16 %v1228, %v1225
    %v1448 = vpack.c.b16 %v1229, %v1226
    %v1449 = vpack.c.b16 %v1230, %v1227
    %v1450 = vpack.c.b16 %v1234, %v1231
    %v1451 = vpack.c.b16 %v1235, %v1232
    %v1452 = vpack.c.b16 %v1236, %v1233
    %v1453 = vpack.c.b16 %v1240, %v1237
    %v1454 = vpack.c.b16 %v1241, %v1238
    %v1455 = vpack.c.b16 %v1242, %v1239
    %v1456 = vpack.c.b16 %v1246, %v1243
    %v1457 = vpack.c.b16 %v1247, %v1244
    %v1458 = vpack.c.b16 %v1248, %v1245
    %v1459 = vpack.c.b16 %v1252, %v1249
    %v1460 = vpack.c.b16 %v1253, %v1250
    %v1461 = vpack.c.b16 %v1254, %v1251
    %v1462 = vpack.c.b16 %v1258, %v1255
    %v1463 = vpack.c.b16 %v1259, %v1256
    %v1464 = vpack.c.b16 %v1260, %v1257
    %v1465 = vpack.c.b16 %v1264, %v1261
    %v1466 = vpack.c.b16 %v1265, %v1262
    %v1467 = vpack.c.b16 %v1266, %v1263
    %v1468 = vpack.c.b16 %v1270, %v1267
    %v1469 = vpack.c.b16 %v1271, %v1268
    %v1470 = vpack.c.b16 %v1272, %v1269
    %v1471 = vpack.c.b16 %v1276, %v1273
    %v1472 = vpack.c.b16 %v1277, %v1274
    %v1473 = vpack.c.b16 %v1278, %v1275
    %v1474 = vpack.c.b16 %v1282, %v1279
    %v1475 = vpack.c.b16 %v1283, %v1280
    %v1476 = vpack.c.b16 %v1284, %v1281
    %1669 = vmatprep.subr.bf16.mxu0 %v1307
    %1670 = vmatpush1.bf16.msra.mxu0 %v1306
    %1671 = vmatprep.subr.bf16.mxu0 %v1304
    %1672 = vmatpush1.bf16.msra.mxu0 %v1303
    %1673 = vmatprep.subr.bf16.mxu0 %v1301
    %1674 = vmatpush1.bf16.msra.mxu0 %v1300
    %1675 = vmatprep.subr.bf16.mxu0 %v1298
    %1676 = vmatpush1.bf16.msra.mxu0 %v1297
    %1677 = vmatprep.subr.bf16.mxu0 %v1295
    %1678 = vmatpush1.bf16.msra.mxu0 %v1294
    %1679 = vmatprep.subr.bf16.mxu0 %v1292
    %1680 = vmatpush1.bf16.msra.mxu0 %v1291
    %1681 = vmatprep.subr.bf16.mxu0 %v1289
    %1682 = vmatpush1.bf16.msra.mxu0 %v1288
    %1683 = vmatprep.subr.bf16.mxu0 %v1286
    %1684 = vmatpush1.bf16.msra.mxu0 %v1285
    %1685 = vmatprep.subr.bf16.mxu0 %v1331
    %1686 = vmatpush2.bf16.msra.mxu0 %v1330
    %1687 = vmatprep.subr.bf16.mxu0 %v1328
    %1688 = vmatpush2.bf16.msra.mxu0 %v1327
    %1689 = vmatprep.subr.bf16.mxu0 %v1325
    %1690 = vmatpush2.bf16.msra.mxu0 %v1324
    %1691 = vmatprep.subr.bf16.mxu0 %v1322
    %1692 = vmatpush2.bf16.msra.mxu0 %v1321
    %1693 = vmatprep.subr.bf16.mxu0 %v1319
    %1694 = vmatpush2.bf16.msra.mxu0 %v1318
    %1695 = vmatprep.subr.bf16.mxu0 %v1316
    %1696 = vmatpush2.bf16.msra.mxu0 %v1315
    %1697 = vmatprep.subr.bf16.mxu0 %v1313
    %1698 = vmatpush2.bf16.msra.mxu0 %v1312
    %1699 = vmatprep.subr.bf16.mxu0 %v1310
    %1700 = vmatpush2.bf16.msra.mxu0 %v1309
    %1701 = vmatprep.mubr.bf16.mxu0 %v365
    %1702 = vmatmul.mubr.bf16.gmra.mxu0 %v364
    %v1703 = vpop.f32.mrf.mxu0
    %v1704 = vadd.f32 %v633, %v1703
    %v1705 = vpop.f32.mrf.mxu0
    %v1706 = vadd.f32 %v637, %v1705
    %v1707 = vpop.f32.mrf.mxu0
    %v1708 = vadd.f32 %v633, %v1707
    %v1709 = vpop.f32.mrf.mxu0
    %v1710 = vadd.f32 %v637, %v1709
    %1711 = vdwg.mxu0
    %1712 = vmatprep.subr.bf16.mxu0 %v1355
    %1713 = vmatpush1.bf16.msra.mxu0 %v1354
    %1714 = vmatprep.subr.bf16.mxu0 %v1352
    %1715 = vmatpush1.bf16.msra.mxu0 %v1351
    %1716 = vmatprep.subr.bf16.mxu0 %v1349
    %1717 = vmatpush1.bf16.msra.mxu0 %v1348
    %1718 = vmatprep.subr.bf16.mxu0 %v1346
    %1719 = vmatpush1.bf16.msra.mxu0 %v1345
    %1720 = vmatprep.subr.bf16.mxu0 %v1343
    %1721 = vmatpush1.bf16.msra.mxu0 %v1342
    %1722 = vmatprep.subr.bf16.mxu0 %v1340
    %1723 = vmatpush1.bf16.msra.mxu0 %v1339
    %1724 = vmatprep.subr.bf16.mxu0 %v1337
    %1725 = vmatpush1.bf16.msra.mxu0 %v1336
    %1726 = vmatprep.subr.bf16.mxu0 %v1334
    %1727 = vmatpush1.bf16.msra.mxu0 %v1333
    %1728 = vmatprep.subr.bf16.mxu0 %v1379
    %1729 = vmatpush2.bf16.msra.mxu0 %v1378
    %1730 = vmatprep.subr.bf16.mxu0 %v1376
    %1731 = vmatpush2.bf16.msra.mxu0 %v1375
    %1732 = vmatprep.subr.bf16.mxu0 %v1373
    %1733 = vmatpush2.bf16.msra.mxu0 %v1372
    %1734 = vmatprep.subr.bf16.mxu0 %v1370
    %1735 = vmatpush2.bf16.msra.mxu0 %v1369
    %1736 = vmatprep.subr.bf16.mxu0 %v1367
    %1737 = vmatpush2.bf16.msra.mxu0 %v1366
    %1738 = vmatprep.subr.bf16.mxu0 %v1364
    %1739 = vmatpush2.bf16.msra.mxu0 %v1363
    %1740 = vmatprep.subr.bf16.mxu0 %v1361
    %1741 = vmatpush2.bf16.msra.mxu0 %v1360
    %1742 = vmatprep.subr.bf16.mxu0 %v1358
    %1743 = vmatpush2.bf16.msra.mxu0 %v1357
    %1744 = vmatprep.mubr.bf16.mxu0 %v367
    %1745 = vmatmul.mubr.bf16.gmra.mxu0 %v366
    %v1746 = vpop.f32.mrf.mxu0
    %v1747 = vadd.f32 %v1704, %v1746
    %v1748 = vpop.f32.mrf.mxu0
    %v1749 = vadd.f32 %v1706, %v1748
    %v1750 = vpop.f32.mrf.mxu0
    %v1751 = vadd.f32 %v1708, %v1750
    %v1752 = vpop.f32.mrf.mxu0
    %v1753 = vadd.f32 %v1710, %v1752
    %1754 = vdwg.mxu0
    %1755 = vmatprep.subr.bf16.mxu0 %v1403
    %1756 = vmatpush1.bf16.msra.mxu0 %v1402
    %1757 = vmatprep.subr.bf16.mxu0 %v1400
    %1758 = vmatpush1.bf16.msra.mxu0 %v1399
    %1759 = vmatprep.subr.bf16.mxu0 %v1397
    %1760 = vmatpush1.bf16.msra.mxu0 %v1396
    %1761 = vmatprep.subr.bf16.mxu0 %v1394
    %1762 = vmatpush1.bf16.msra.mxu0 %v1393
    %1763 = vmatprep.subr.bf16.mxu0 %v1391
    %1764 = vmatpush1.bf16.msra.mxu0 %v1390
    %1765 = vmatprep.subr.bf16.mxu0 %v1388
    %1766 = vmatpush1.bf16.msra.mxu0 %v1387
    %1767 = vmatprep.subr.bf16.mxu0 %v1385
    %1768 = vmatpush1.bf16.msra.mxu0 %v1384
    %1769 = vmatprep.subr.bf16.mxu0 %v1382
    %1770 = vmatpush1.bf16.msra.mxu0 %v1381
    %1771 = vmatprep.subr.bf16.mxu0 %v1427
    %1772 = vmatpush2.bf16.msra.mxu0 %v1426
    %1773 = vmatprep.subr.bf16.mxu0 %v1424
    %1774 = vmatpush2.bf16.msra.mxu0 %v1423
    %1775 = vmatprep.subr.bf16.mxu0 %v1421
    %1776 = vmatpush2.bf16.msra.mxu0 %v1420
    %1777 = vmatprep.subr.bf16.mxu0 %v1418
    %1778 = vmatpush2.bf16.msra.mxu0 %v1417
    %1779 = vmatprep.subr.bf16.mxu0 %v1415
    %1780 = vmatpush2.bf16.msra.mxu0 %v1414
    %1781 = vmatprep.subr.bf16.mxu0 %v1412
    %1782 = vmatpush2.bf16.msra.mxu0 %v1411
    %1783 = vmatprep.subr.bf16.mxu0 %v1409
    %1784 = vmatpush2.bf16.msra.mxu0 %v1408
    %1785 = vmatprep.subr.bf16.mxu0 %v1406
    %1786 = vmatpush2.bf16.msra.mxu0 %v1405
    %1787 = vmatprep.mubr.bf16.mxu0 %v369
    %1788 = vmatmul.mubr.bf16.gmra.mxu0 %v368
    %v1789 = vpop.f32.mrf.mxu0
    %v1790 = vadd.f32 %v1747, %v1789
    %v1791 = vpop.f32.mrf.mxu0
    %v1792 = vadd.f32 %v1749, %v1791
    %v1793 = vpop.f32.mrf.mxu0
    %v1794 = vadd.f32 %v1751, %v1793
    %v1795 = vpop.f32.mrf.mxu0
    %v1796 = vadd.f32 %v1753, %v1795
    %1797 = vdwg.mxu0
    %1798 = vmatprep.subr.bf16.mxu0 %v1451
    %1799 = vmatpush1.bf16.msra.mxu0 %v1450
    %1800 = vmatprep.subr.bf16.mxu0 %v1448
    %1801 = vmatpush1.bf16.msra.mxu0 %v1447
    %1802 = vmatprep.subr.bf16.mxu0 %v1445
    %1803 = vmatpush1.bf16.msra.mxu0 %v1444
    %1804 = vmatprep.subr.bf16.mxu0 %v1442
    %1805 = vmatpush1.bf16.msra.mxu0 %v1441
    %1806 = vmatprep.subr.bf16.mxu0 %v1439
    %1807 = vmatpush1.bf16.msra.mxu0 %v1438
    %1808 = vmatprep.subr.bf16.mxu0 %v1436
    %1809 = vmatpush1.bf16.msra.mxu0 %v1435
    %1810 = vmatprep.subr.bf16.mxu0 %v1433
    %1811 = vmatpush1.bf16.msra.mxu0 %v1432
    %1812 = vmatprep.subr.bf16.mxu0 %v1430
    %1813 = vmatpush1.bf16.msra.mxu0 %v1429
    %1814 = vmatprep.subr.bf16.mxu0 %v1475
    %1815 = vmatpush2.bf16.msra.mxu0 %v1474
    %1816 = vmatprep.subr.bf16.mxu0 %v1472
    %1817 = vmatpush2.bf16.msra.mxu0 %v1471
    %1818 = vmatprep.subr.bf16.mxu0 %v1469
    %1819 = vmatpush2.bf16.msra.mxu0 %v1468
    %1820 = vmatprep.subr.bf16.mxu0 %v1466
    %1821 = vmatpush2.bf16.msra.mxu0 %v1465
    %1822 = vmatprep.subr.bf16.mxu0 %v1463
    %1823 = vmatpush2.bf16.msra.mxu0 %v1462
    %1824 = vmatprep.subr.bf16.mxu0 %v1460
    %1825 = vmatpush2.bf16.msra.mxu0 %v1459
    %1826 = vmatprep.subr.bf16.mxu0 %v1457
    %1827 = vmatpush2.bf16.msra.mxu0 %v1456
    %1828 = vmatprep.subr.bf16.mxu0 %v1454
    %1829 = vmatpush2.bf16.msra.mxu0 %v1453
    %1830 = vmatprep.mubr.bf16.mxu0 %v371
    %1831 = vmatmul.mubr.bf16.gmra.mxu0 %v370
    %v1832 = vpop.f32.mrf.mxu0
    %v1833 = vadd.f32 %v1790, %v1832
    %v1834 = vpop.f32.mrf.mxu0
    %v1835 = vadd.f32 %v1792, %v1834
    %v1836 = vpop.f32.mrf.mxu0
    %v1837 = vadd.f32 %v1794, %v1836
    %v1838 = vpop.f32.mrf.mxu0
    %v1839 = vadd.f32 %v1796, %v1838
    %1840 = vdwg.mxu0
    %1841 = vmatprep.subr.bf16.mxu0 0
    %1842 = vmatpush1.bf16.msra.mxu0 %v1308
    %1843 = vmatprep.subr.bf16.mxu0 0
    %1844 = vmatpush1.bf16.msra.mxu0 %v1305
    %1845 = vmatprep.subr.bf16.mxu0 0
    %1846 = vmatpush1.bf16.msra.mxu0 %v1302
    %1847 = vmatprep.subr.bf16.mxu0 0
    %1848 = vmatpush1.bf16.msra.mxu0 %v1299
    %1849 = vmatprep.subr.bf16.mxu0 0
    %1850 = vmatpush1.bf16.msra.mxu0 %v1296
    %1851 = vmatprep.subr.bf16.mxu0 0
    %1852 = vmatpush1.bf16.msra.mxu0 %v1293
    %1853 = vmatprep.subr.bf16.mxu0 0
    %1854 = vmatpush1.bf16.msra.mxu0 %v1290
    %1855 = vmatprep.subr.bf16.mxu0 0
    %1856 = vmatpush1.bf16.msra.mxu0 %v1287
    %1857 = vmatprep.subr.bf16.mxu0 0
    %1858 = vmatpush2.bf16.msra.mxu0 %v1332
    %1859 = vmatprep.subr.bf16.mxu0 0
    %1860 = vmatpush2.bf16.msra.mxu0 %v1329
    %1861 = vmatprep.subr.bf16.mxu0 0
    %1862 = vmatpush2.bf16.msra.mxu0 %v1326
    %1863 = vmatprep.subr.bf16.mxu0 0
    %1864 = vmatpush2.bf16.msra.mxu0 %v1323
    %1865 = vmatprep.subr.bf16.mxu0 0
    %1866 = vmatpush2.bf16.msra.mxu0 %v1320
    %1867 = vmatprep.subr.bf16.mxu0 0
    %1868 = vmatpush2.bf16.msra.mxu0 %v1317
    %1869 = vmatprep.subr.bf16.mxu0 0
    %1870 = vmatpush2.bf16.msra.mxu0 %v1314
    %1871 = vmatprep.subr.bf16.mxu0 0
    %1872 = vmatpush2.bf16.msra.mxu0 %v1311
    %1873 = vmatprep.mubr.bf16.mxu0 %v365
    %1874 = vmatmul.mubr.bf16.gmra.mxu0 %v364
    %v1875 = vpop.f32.mrf.mxu0
    %v1876 = vadd.f32 %v641, %v1875
    %v1877 = vpop.f32.mrf.mxu0
    %v1878 = vpop.f32.mrf.mxu0
    %v1879 = vadd.f32 %v641, %v1878
    %v1880 = vpop.f32.mrf.mxu0
    %1881 = vdwg.mxu0
    %1882 = vmatprep.subr.bf16.mxu0 0
    %1883 = vmatpush1.bf16.msra.mxu0 %v1356
    %1884 = vmatprep.subr.bf16.mxu0 0
    %1885 = vmatpush1.bf16.msra.mxu0 %v1353
    %1886 = vmatprep.subr.bf16.mxu0 0
    %1887 = vmatpush1.bf16.msra.mxu0 %v1350
    %1888 = vmatprep.subr.bf16.mxu0 0
    %1889 = vmatpush1.bf16.msra.mxu0 %v1347
    %1890 = vmatprep.subr.bf16.mxu0 0
    %1891 = vmatpush1.bf16.msra.mxu0 %v1344
    %1892 = vmatprep.subr.bf16.mxu0 0
    %1893 = vmatpush1.bf16.msra.mxu0 %v1341
    %1894 = vmatprep.subr.bf16.mxu0 0
    %1895 = vmatpush1.bf16.msra.mxu0 %v1338
    %1896 = vmatprep.subr.bf16.mxu0 0
    %1897 = vmatpush1.bf16.msra.mxu0 %v1335
    %1898 = vmatprep.subr.bf16.mxu0 0
    %1899 = vmatpush2.bf16.msra.mxu0 %v1380
    %1900 = vmatprep.subr.bf16.mxu0 0
    %1901 = vmatpush2.bf16.msra.mxu0 %v1377
    %1902 = vmatprep.subr.bf16.mxu0 0
    %1903 = vmatpush2.bf16.msra.mxu0 %v1374
    %1904 = vmatprep.subr.bf16.mxu0 0
    %1905 = vmatpush2.bf16.msra.mxu0 %v1371
    %1906 = vmatprep.subr.bf16.mxu0 0
    %1907 = vmatpush2.bf16.msra.mxu0 %v1368
    %1908 = vmatprep.subr.bf16.mxu0 0
    %1909 = vmatpush2.bf16.msra.mxu0 %v1365
    %1910 = vmatprep.subr.bf16.mxu0 0
    %1911 = vmatpush2.bf16.msra.mxu0 %v1362
    %1912 = vmatprep.subr.bf16.mxu0 0
    %1913 = vmatpush2.bf16.msra.mxu0 %v1359
    %1914 = vmatprep.mubr.bf16.mxu0 %v367
    %1915 = vmatmul.mubr.bf16.gmra.mxu0 %v366
    %v1916 = vpop.f32.mrf.mxu0
    %v1917 = vadd.f32 %v1876, %v1916
    %v1918 = vpop.f32.mrf.mxu0
    %v1919 = vpop.f32.mrf.mxu0
    %v1920 = vadd.f32 %v1879, %v1919
    %v1921 = vpop.f32.mrf.mxu0
    %1922 = vdwg.mxu0
    %1923 = vmatprep.subr.bf16.mxu0 0
    %1924 = vmatpush1.bf16.msra.mxu0 %v1404
    %1925 = vmatprep.subr.bf16.mxu0 0
    %1926 = vmatpush1.bf16.msra.mxu0 %v1401
    %1927 = vmatprep.subr.bf16.mxu0 0
    %1928 = vmatpush1.bf16.msra.mxu0 %v1398
    %1929 = vmatprep.subr.bf16.mxu0 0
    %1930 = vmatpush1.bf16.msra.mxu0 %v1395
    %1931 = vmatprep.subr.bf16.mxu0 0
    %1932 = vmatpush1.bf16.msra.mxu0 %v1392
    %1933 = vmatprep.subr.bf16.mxu0 0
    %1934 = vmatpush1.bf16.msra.mxu0 %v1389
    %1935 = vmatprep.subr.bf16.mxu0 0
    %1936 = vmatpush1.bf16.msra.mxu0 %v1386
    %1937 = vmatprep.subr.bf16.mxu0 0
    %1938 = vmatpush1.bf16.msra.mxu0 %v1383
    %1939 = vmatprep.subr.bf16.mxu0 0
    %1940 = vmatpush2.bf16.msra.mxu0 %v1428
    %1941 = vmatprep.subr.bf16.mxu0 0
    %1942 = vmatpush2.bf16.msra.mxu0 %v1425
    %1943 = vmatprep.subr.bf16.mxu0 0
    %1944 = vmatpush2.bf16.msra.mxu0 %v1422
    %1945 = vmatprep.subr.bf16.mxu0 0
    %1946 = vmatpush2.bf16.msra.mxu0 %v1419
    %1947 = vmatprep.subr.bf16.mxu0 0
    %1948 = vmatpush2.bf16.msra.mxu0 %v1416
    %1949 = vmatprep.subr.bf16.mxu0 0
    %1950 = vmatpush2.bf16.msra.mxu0 %v1413
    %1951 = vmatprep.subr.bf16.mxu0 0
    %1952 = vmatpush2.bf16.msra.mxu0 %v1410
    %1953 = vmatprep.subr.bf16.mxu0 0
    %1954 = vmatpush2.bf16.msra.mxu0 %v1407
    %1955 = vmatprep.mubr.bf16.mxu0 %v369
    %1956 = vmatmul.mubr.bf16.gmra.mxu0 %v368
    %v1957 = vpop.f32.mrf.mxu0
    %v1958 = vadd.f32 %v1917, %v1957
    %v1959 = vpop.f32.mrf.mxu0
    %v1960 = vpop.f32.mrf.mxu0
    %v1961 = vadd.f32 %v1920, %v1960
    %v1962 = vpop.f32.mrf.mxu0
    %1963 = vdwg.mxu0
    %1964 = vmatprep.subr.bf16.mxu0 0
    %1965 = vmatpush1.bf16.msra.mxu0 %v1452
    %1966 = vmatprep.subr.bf16.mxu0 0
    %1967 = vmatpush1.bf16.msra.mxu0 %v1449
    %1968 = vmatprep.subr.bf16.mxu0 0
    %1969 = vmatpush1.bf16.msra.mxu0 %v1446
    %1970 = vmatprep.subr.bf16.mxu0 0
    %1971 = vmatpush1.bf16.msra.mxu0 %v1443
    %1972 = vmatprep.subr.bf16.mxu0 0
    %1973 = vmatpush1.bf16.msra.mxu0 %v1440
    %1974 = vmatprep.subr.bf16.mxu0 0
    %1975 = vmatpush1.bf16.msra.mxu0 %v1437
    %1976 = vmatprep.subr.bf16.mxu0 0
    %1977 = vmatpush1.bf16.msra.mxu0 %v1434
    %1978 = vmatprep.subr.bf16.mxu0 0
    %1979 = vmatpush1.bf16.msra.mxu0 %v1431
    %1980 = vmatprep.subr.bf16.mxu0 0
    %1981 = vmatpush2.bf16.msra.mxu0 %v1476
    %1982 = vmatprep.subr.bf16.mxu0 0
    %1983 = vmatpush2.bf16.msra.mxu0 %v1473
    %1984 = vmatprep.subr.bf16.mxu0 0
    %1985 = vmatpush2.bf16.msra.mxu0 %v1470
    %1986 = vmatprep.subr.bf16.mxu0 0
    %1987 = vmatpush2.bf16.msra.mxu0 %v1467
    %1988 = vmatprep.subr.bf16.mxu0 0
    %1989 = vmatpush2.bf16.msra.mxu0 %v1464
    %1990 = vmatprep.subr.bf16.mxu0 0
    %1991 = vmatpush2.bf16.msra.mxu0 %v1461
    %1992 = vmatprep.subr.bf16.mxu0 0
    %1993 = vmatpush2.bf16.msra.mxu0 %v1458
    %1994 = vmatprep.subr.bf16.mxu0 0
    %1995 = vmatpush2.bf16.msra.mxu0 %v1455
    %1996 = vmatprep.mubr.bf16.mxu0 %v371
    %1997 = vmatmul.mubr.bf16.gmra.mxu0 %v370
    %v1998 = vpop.f32.mrf.mxu0
    %v1999 = vadd.f32 %v1958, %v1998
    %v2000 = vpop.f32.mrf.mxu0
    %v2001 = vpop.f32.mrf.mxu0
    %v2002 = vadd.f32 %v1961, %v2001
    %v2003 = vpop.f32.mrf.mxu0
    %2004 = vdwg.mxu0
    %v2005 = vmax.f32 %v1833, 0.0
    %v2006 = vmax.f32 %v1835, 0.0
    %v2007 = vmax.f32 %v1999, 0.0
    %v2008 = vmax.f32 %v1837, 0.0
    %v2009 = vmax.f32 %v1839, 0.0
    %v2010 = vmax.f32 %v2002, 0.0
    %v2017 = vcombine.low %v2005, %v2006
    %v2018 = vcombine.high %v2005, %v2006
    %v2019 = vcombine.high %v2007, %v2007
    %v2021 = vunpack.c.l.s4 1966171168
    %v2022 = vunpack.c.0.s8 %v2021
    %v2023 = vlaneseq
    %v2024 = vshrl.u32 %v2023, 7
    %v2025 = vsub.s32 %v2022, %v2024
    %v2026 = vrot.slane %v2017, %v2025
    %v2028 = vunpack.c.l.s4 1966171168
    %v2029 = vunpack.c.0.s8 %v2028
    %v2030 = vlaneseq
    %v2031 = vshrl.u32 %v2030, 7
    %v2032 = vsub.s32 %v2029, %v2031
    %v2033 = vrot.slane %v2018, %v2032
    %v2035 = vunpack.c.l.s4 1966171168
    %v2036 = vunpack.c.0.s8 %v2035
    %v2037 = vlaneseq
    %v2038 = vshrl.u32 %v2037, 7
    %v2039 = vsub.s32 %v2036, %v2038
    %v2040 = vrot.slane %v2007, %v2039
    %v2042 = vunpack.c.l.s4 1966171168
    %v2043 = vunpack.c.0.s8 %v2042
    %v2044 = vlaneseq
    %v2045 = vshrl.u32 %v2044, 7
    %v2046 = vsub.s32 %v2043, %v2045
    %v2047 = vrot.slane %v2019, %v2046
    %v2048 = vcombine.low %v2026, %v2040
    %v2049 = vcombine.high %v2026, %v2040
    %v2050 = vcombine.low %v2033, %v2047
    %v2051 = vcombine.high %v2033, %v2047
    %v2053 = vunpack.c.l.s4 1966171168
    %v2054 = vunpack.c.0.s8 %v2053
    %v2055 = vlaneseq
    %v2056 = vshrl.u32 %v2055, 7
    %v2057 = vsub.s32 %v2054, %v2056
    %v2058 = vrot.slane %v2048, %v2057
    %v2060 = vunpack.c.l.s4 1966171168
    %v2061 = vunpack.c.0.s8 %v2060
    %v2062 = vlaneseq
    %v2063 = vshrl.u32 %v2062, 7
    %v2064 = vsub.s32 %v2061, %v2063
    %v2065 = vrot.slane %v2050, %v2064
    %v2067 = vunpack.c.l.s4 1966171168
    %v2068 = vunpack.c.0.s8 %v2067
    %v2069 = vlaneseq
    %v2070 = vshrl.u32 %v2069, 7
    %v2071 = vsub.s32 %v2068, %v2070
    %v2072 = vrot.slane %v2049, %v2071
    %v2074 = vunpack.c.l.s4 1966171168
    %v2075 = vunpack.c.0.s8 %v2074
    %v2076 = vlaneseq
    %v2077 = vshrl.u32 %v2076, 7
    %v2078 = vsub.s32 %v2075, %v2077
    %v2079 = vrot.slane %v2051, %v2078
    %v2080 = vcombine.high %v2058, %v2058
    %v2081 = vcombine.high %v2065, %v2065
    %v2082 = vcombine.high %v2072, %v2072
    %v2083 = vcombine.high %v2079, %v2079
    %v2084 = vcombine.low %v2008, %v2009
    %v2085 = vcombine.high %v2008, %v2009
    %v2086 = vcombine.high %v2010, %v2010
    %v2088 = vunpack.c.l.s4 1966171168
    %v2089 = vunpack.c.0.s8 %v2088
    %v2090 = vlaneseq
    %v2091 = vshrl.u32 %v2090, 7
    %v2092 = vsub.s32 %v2089, %v2091
    %v2093 = vrot.slane %v2084, %v2092
    %v2095 = vunpack.c.l.s4 1966171168
    %v2096 = vunpack.c.0.s8 %v2095
    %v2097 = vlaneseq
    %v2098 = vshrl.u32 %v2097, 7
    %v2099 = vsub.s32 %v2096, %v2098
    %v2100 = vrot.slane %v2085, %v2099
    %v2102 = vunpack.c.l.s4 1966171168
    %v2103 = vunpack.c.0.s8 %v2102
    %v2104 = vlaneseq
    %v2105 = vshrl.u32 %v2104, 7
    %v2106 = vsub.s32 %v2103, %v2105
    %v2107 = vrot.slane %v2010, %v2106
    %v2109 = vunpack.c.l.s4 1966171168
    %v2110 = vunpack.c.0.s8 %v2109
    %v2111 = vlaneseq
    %v2112 = vshrl.u32 %v2111, 7
    %v2113 = vsub.s32 %v2110, %v2112
    %v2114 = vrot.slane %v2086, %v2113
    %v2115 = vcombine.low %v2093, %v2107
    %v2116 = vcombine.high %v2093, %v2107
    %v2117 = vcombine.low %v2100, %v2114
    %v2118 = vcombine.high %v2100, %v2114
    %v2120 = vunpack.c.l.s4 1966171168
    %v2121 = vunpack.c.0.s8 %v2120
    %v2122 = vlaneseq
    %v2123 = vshrl.u32 %v2122, 7
    %v2124 = vsub.s32 %v2121, %v2123
    %v2125 = vrot.slane %v2115, %v2124
    %v2127 = vunpack.c.l.s4 1966171168
    %v2128 = vunpack.c.0.s8 %v2127
    %v2129 = vlaneseq
    %v2130 = vshrl.u32 %v2129, 7
    %v2131 = vsub.s32 %v2128, %v2130
    %v2132 = vrot.slane %v2117, %v2131
    %v2134 = vunpack.c.l.s4 1966171168
    %v2135 = vunpack.c.0.s8 %v2134
    %v2136 = vlaneseq
    %v2137 = vshrl.u32 %v2136, 7
    %v2138 = vsub.s32 %v2135, %v2137
    %v2139 = vrot.slane %v2116, %v2138
    %v2141 = vunpack.c.l.s4 1966171168
    %v2142 = vunpack.c.0.s8 %v2141
    %v2143 = vlaneseq
    %v2144 = vshrl.u32 %v2143, 7
    %v2145 = vsub.s32 %v2142, %v2144
    %v2146 = vrot.slane %v2118, %v2145
    %v2147 = vcombine.high %v2125, %v2125
    %v2148 = vcombine.high %v2132, %v2132
    %v2149 = vcombine.high %v2139, %v2139
    %v2150 = vcombine.high %v2146, %v2146
    %v2167 = vlaneseq
    %vm2168 = vcmp.ge.s32.totalorder %v2167, 0
    %vm2169 = vcmp.lt.s32.totalorder %v2167, 384
    %vm2170 = vmand %vm2168, %vm2169
    %2171 = vst.msk [vmem:[#allocation7] sm:$0x7] %vm2170, %v2058
    %2172 = vst.msk [vmem:[#allocation7 + $0x3] sm:$0x7] %vm2170, %v2072
    %2173 = vst.msk [vmem:[#allocation7 + $0x6] sm:$0x7] %vm2170, %v2080
    %2174 = vst.msk [vmem:[#allocation7 + $0x9] sm:$0x7] %vm2170, %v2082
    %2175 = vst.msk [vmem:[#allocation7 + $0xc] sm:$0x7] %vm2170, %v2065
    %2176 = vst.msk [vmem:[#allocation7 + $0xf] sm:$0x7] %vm2170, %v2079
    %2177 = vst.msk [vmem:[#allocation7 + $0x12] sm:$0x7] %vm2170, %v2081
    %2178 = vst.msk [vmem:[#allocation7 + $0x15] sm:$0x7] %vm2170, %v2083
    %2179 = vst.msk [vmem:[#allocation7 + $0x18] sm:$0x7] %vm2170, %v2125
    %2180 = vst.msk [vmem:[#allocation7 + $0x1b] sm:$0x7] %vm2170, %v2139
    %2181 = vst.msk [vmem:[#allocation7 + $0x1e] sm:$0x7] %vm2170, %v2147
    %2182 = vst.msk [vmem:[#allocation7 + $0x21] sm:$0x7] %vm2170, %v2149
    %2183 = vst.msk [vmem:[#allocation7 + $0x24] sm:$0x7] %vm2170, %v2132
    %2184 = vst.msk [vmem:[#allocation7 + $0x27] sm:$0x7] %vm2170, %v2146
    %2185 = vst.msk [vmem:[#allocation7 + $0x2a] sm:$0x7] %vm2170, %v2148
    %2186 = vst.msk [vmem:[#allocation7 + $0x2d] sm:$0x7] %vm2170, %v2150
    // Predicated region
    $region22: #{tpu_custom_call.1} parent=1 // pred_check
      _
    $region23: #{tpu_custom_call.1} parent=1 // pred_check_branch
      %2188 = sbr.rel (0) target = $region25
    $region24: #{tpu_custom_call.1} parent=1 // pred_region
      %s2190 = ssub.s32 768, 48
      %2191 = vsyncadd [#allocation4], %s2190
      %s2192 = sshll.u32 [#allocation7], 4
      %s2193 = int_to_ptr.vmem [resolvable:$true] %s2192
      %2198 = dma.vmem_to_hbm [thread:$0]  %s2193, 48, %s3, [#allocation4], 48, 48, 3
    $region25: #{tpu_custom_call.1} parent=1 // pred_fallthru
      _
    // Predicated region
    $region26: #{tpu_custom_call.1} parent=1 // pred_check
      _
    $region27: #{tpu_custom_call.1} parent=1 // pred_check_branch
      %2200 = sbr.rel (0) target = $region29
    $region28: #{tpu_custom_call.1} parent=1 // pred_region
      %2201 = dma.done [#allocation4], 768
    $region29: #{tpu_custom_call.1} parent=1 // pred_fallthru
      _
    %2202 = vsyncpa [#allocation3], 1
    %2203 = vsyncpa [#allocation6], 1
    %2204 = vsyncpa [#allocation4], 1

</llo_original>
